<compile_context>
chip_gen: v7x
topology: tpu7x:2x2x1
jax: 0.10.0
libtpu: 0.0.40
codegen_flags: <defaults>
</compile_context>

<pallas_src>
import functools

import jax
import jax.numpy as jnp
from jax.experimental import pallas as pl
from jax.experimental.pallas import tpu as pltpu

_LANE = 128
_MIN_TB = 16   # bf16 sublane packing: keep batch tiles a multiple of 16


def _round_up(a, b):
    return (a + b - 1) // b * b


def pack_highway_lstm_params(w_ih, b_ih, w_hh, *, mxu_dtype=jnp.bfloat16):
    """Pack PyTorch-layout weights into one gate-major, lane-padded slab.

    w_ih: [6H, D_in], b_ih: [6H], w_hh: [5H, H]   (nn.Linear layouts)

    Gate order along the packed output axis is [i, f, o, t, j, k], each Hp
    lanes wide.  The forget-gate +1.0 is folded into the bias, and the four
    sigmoid gates' weight/bias columns are pre-scaled by 0.5 so the kernel
    computes sigmoid(z) as 0.5*tanh(z_packed)+0.5 with no extra VPU work.

    Returns:
      w_packed: [Dp + Hp, 6*Hp]  (rows [0,D_in): input->gate,
                                  rows [Dp,Dp+H): hidden->gate; gate k has no
                                  hidden term and is zero there)
      b_packed: [1, 6*Hp] float32
    Call ONCE outside any timestep loop.
    """
    six_h, d_in = w_ih.shape
    h = six_h // 6
    hp = _round_up(h, _LANE)
    dp = _round_up(d_in, _LANE)

    # 0.5 pre-scale for the sigmoid gates (i, f, o, t); tanh gate j and the
    # linear highway candidate k are untouched.  0.5 is exact in bf16.
    gate_scale = jnp.array([0.5, 0.5, 0.5, 0.5, 1.0, 1.0], dtype=jnp.float32)

    # input -> gates : [6H, D] -> [D, 6, H] -> scale -> pad -> [Dp, 6*Hp]
    wx = jnp.transpose(w_ih.astype(jnp.float32).reshape(6, h, d_in), (2, 0, 1))
    wx = wx * gate_scale[None, :, None]
    wx = jnp.pad(wx, ((0, dp - d_in), (0, 0), (0, hp - h))).reshape(dp, 6 * hp)

    # hidden -> gates : [5H, H] -> [H, 5, H] -> scale -> pad gate axis to 6
    wh = jnp.transpose(w_hh.astype(jnp.float32).reshape(5, h, h), (2, 0, 1))
    wh = wh * gate_scale[None, :5, None]
    wh = jnp.pad(wh, ((0, hp - h), (0, 1), (0, hp - h))).reshape(hp, 6 * hp)

    w_packed = jnp.concatenate([wx, wh], axis=0).astype(mxu_dtype)

    b = b_ih.astype(jnp.float32).reshape(6, h)
    b = b.at[1].add(1.0)                      # fold the forget-gate +1.0
    b = b * gate_scale[:, None]
    b_packed = jnp.pad(b, ((0, 0), (0, hp - h))).reshape(1, 6 * hp)
    return w_packed, b_packed


def _highway_lstm_kernel(x_ref, h_ref, c_ref, mask_ref, w_ref, b_ref,
                         h_out_ref, c_out_ref, *, hp, dp):
    mxu_dtype = w_ref.dtype
    x = x_ref[...]
    h_prev_raw = h_ref[...]

    # Two MXU dots against static views of the weight slab (no VMEM scratch
    # roundtrip); f32 accumulation either way.
    g = jnp.dot(x.astype(mxu_dtype), w_ref[:dp, :],
                preferred_element_type=jnp.float32)
    g = g + jnp.dot(h_prev_raw.astype(mxu_dtype), w_ref[dp:, :],
                    preferred_element_type=jnp.float32)
    g = g + b_ref[...]                                   # [tb, 6*Hp] f32

    # Sigmoid gates were pre-scaled by 0.5 (and forget +1.0 folded) at pack
    # time: sigmoid(z) == 0.5*tanh(0.5*z) + 0.5, so only one EUP op + fma here.
    i_g = 0.5 * jnp.tanh(g[:, 0 * hp:1 * hp]) + 0.5
    f_g = 0.5 * jnp.tanh(g[:, 1 * hp:2 * hp]) + 0.5
    o_g = 0.5 * jnp.tanh(g[:, 2 * hp:3 * hp]) + 0.5
    t_g = 0.5 * jnp.tanh(g[:, 3 * hp:4 * hp]) + 0.5
    j_g = jnp.tanh(g[:, 4 * hp:5 * hp])
    k_g = g[:, 5 * hp:6 * hp]                 # highway candidate (ih-only)

    h_prev = h_prev_raw.astype(jnp.float32)
    c_prev = c_ref[...].astype(jnp.float32)
    # Hoisted lane-broadcast of the sequence mask (reused by both blends).
    mask_b = jnp.broadcast_to(mask_ref[...].astype(jnp.float32),
                              (x.shape[0], hp))

    c_cand = f_g * c_prev + i_g * j_g
    c_new = c_prev + mask_b * (c_cand - c_prev)   # == m*c_cand + (1-m)*c_prev

    h_cand = t_g * o_g * jnp.tanh(c_new) + (1.0 - t_g) * k_g
    # TODO(synk): optional `dropout` callable applied to h is omitted
    # (inference path).
    h_new = h_prev + mask_b * (h_cand - h_prev)   # == m*h_cand + (1-m)*h_prev

    h_out_ref[...] = h_new.astype(h_out_ref.dtype)
    c_out_ref[...] = c_new.astype(c_out_ref.dtype)


def _vmem_budget_bytes():
    """Generation-aware VMEM budget for tile selection / vmem_limit_bytes."""
    try:
        cap = int(pltpu.get_tpu_info().vmem_capacity_bytes)
    except Exception:
        cap = 64 * 1024 * 1024                # conservative default (v7x per-TC)
    if cap <= 80 * 1024 * 1024:               # v7x: 64 MiB per TC -> ~42 MiB
        return int(cap * 0.66)
    return min(int(cap * 0.78), 104 * 1024 * 1024)   # v5e/v6e: ~100 MiB


def _vmem_estimate(tb, dp, hp, act_bytes, mxu_bytes, w_bytes, b_bytes,
                   weight_bufs):
    # Double-buffered activation tiles (inputs + outputs); c is always f32.
    in_tiles = tb * dp * act_bytes + tb * hp * act_bytes + tb * hp * 4 \
        + tb * 4                                    # x, h, c, mask
    out_tiles = tb * hp * act_bytes + tb * hp * 4   # h_out, c_out (f32)
    resident = weight_bufs * (w_bytes + b_bytes)
    # In-kernel temporaries: f32 gate slab [tb,6*hp], ~12 live [tb,hp] f32
    # arrays (gates, blends, casts, mask broadcast), plus MXU-dtype casts of
    # x and h, plus a couple of MiB of Mosaic internal scratch headroom.
    temps = (6 + 12) * tb * hp * 4 + tb * (dp + hp) * mxu_bytes
    return 2 * (in_tiles + out_tiles) + resident + temps + (2 << 20)


def _align_down(tb):
    if tb >= 256:
        return tb // 256 * 256      # full-height M tiles for the 256x256 MXU
    if tb >= 128:
        return 128
    return max(_MIN_TB, tb // 16 * 16)


def highway_lstm_cell(x, mask, h, c, w_packed, b_packed, *, block_b=512,
                      activation_dtype=None):
    """One Highway-LSTM cell step.

    x: [B, D_in], mask: [B, 1], h: [B, H], c: [B, H].
    Returns (h_new [B,H] in the activation dtype, c_new [B,H] in float32).
    """
    b_dim, d_in = x.shape
    hid = h.shape[1]
    hp = _round_up(hid, _LANE)
    dp = _round_up(d_in, _LANE)
    assert w_packed.shape == (dp + hp, 6 * hp), w_packed.shape

    act_dtype = jnp.dtype(activation_dtype) if activation_dtype is not None \
        else jnp.dtype(x.dtype)
    x = x.astype(act_dtype)
    h = h.astype(act_dtype)
    c = c.astype(jnp.float32)       # cell state stays f32 (no compounding loss)
    mask = mask.astype(jnp.float32)

    act_bytes = act_dtype.itemsize
    mxu_bytes = jnp.dtype(w_packed.dtype).itemsize
    w_bytes, b_bytes = w_packed.nbytes, b_packed.nbytes

    budget = _vmem_budget_bytes()

    # Batch tile: biggest aligned tile that fits the budget (weights resident,
    # single-buffered).
    tb = _align_down(max(_MIN_TB, min(block_b, _round_up(b_dim, _MIN_TB))))
    while tb > _MIN_TB and _vmem_estimate(
            tb, dp, hp, act_bytes, mxu_bytes, w_bytes, b_bytes, 1) > budget:
        tb = _align_down(max(_MIN_TB, tb // 2))

    # Give the "parallel" batch axis >= 2 tiles so v7x's two TensorCores both
    # get work (near-free on single-core v5e/v6e).
    if b_dim > _MIN_TB and _round_up(b_dim, tb) // tb < 2:
        tb = min(tb, max(_MIN_TB, _round_up(pl.cdiv(b_dim, 2), _MIN_TB)))

    bp = _round_up(b_dim, tb)

    # TODO(synk): for recurrent use, move the timestep loop inside a single
    # pallas_call (batch axis "parallel", T axis "arbitrary", h/c as VMEM
    # accumulators) so state never round-trips HBM and W is DMA'd once.
    x_p = jnp.pad(x, ((0, bp - b_dim), (0, dp - d_in)))
    h_p = jnp.pad(h, ((0, bp - b_dim), (0, hp - hid)))
    c_p = jnp.pad(c, ((0, bp - b_dim), (0, hp - hid)))
    m_p = jnp.pad(mask, ((0, bp - b_dim), (0, 0)))

    grid = (bp // tb,)
    row_spec = lambda cols: pl.BlockSpec((tb, cols), lambda i: (i, 0))
    kernel = functools.partial(_highway_lstm_kernel, hp=hp, dp=dp)

    cost = pl.CostEstimate(
        flops=2 * bp * (dp + hp) * 6 * hp + 30 * bp * hp,
        transcendentals=6 * bp * hp,
        bytes_accessed=(x_p.nbytes + h_p.nbytes + c_p.nbytes + m_p.nbytes
                        + w_bytes + b_bytes
                        + bp * hp * act_bytes + bp * hp * 4))

    def _run(weight_mode):
        w_kwargs = {} if weight_mode is None else {"pipeline_mode": weight_mode}
        out = pl.pallas_call(
            kernel,
            out_shape=(jax.ShapeDtypeStruct((bp, hp), act_dtype),
                       jax.ShapeDtypeStruct((bp, hp), jnp.float32)),
            grid=grid,
            in_specs=[row_spec(dp),                                   # x tile
                      row_spec(hp),                                   # h tile
                      row_spec(hp),                                   # c tile
                      row_spec(1),                                    # mask tile
                      pl.BlockSpec((dp + hp, 6 * hp), lambda i: (0, 0),
                                   **w_kwargs),                       # W (resident)
                      pl.BlockSpec((1, 6 * hp), lambda i: (0, 0),
                                   **w_kwargs)],                      # bias (resident)
            out_specs=(row_spec(hp), row_spec(hp)),
            compiler_params=pltpu.CompilerParams(
                dimension_semantics=("parallel",),
                vmem_limit_bytes=int(budget)),
            cost_estimate=cost,
        )(x_p, h_p, c_p, m_p, w_packed, b_packed)
        return jax.block_until_ready(out)

    try:
        # Grid-invariant weight/bias blocks: single-buffer them (halves their
        # VMEM residency; the index_map is constant so no refetch ever happens).
        h_new, c_new = _run(pl.Buffered(1))
    except Exception:
        # Fallback for environments where single-buffering is rejected.
        h_new, c_new = _run(None)

    return h_new[:b_dim, :hid], c_new[:b_dim, :hid]


def _reference(x, mask, h, c, w_ih, b_ih, w_hh):
    hid = h.shape[1]
    _x = x @ w_ih.T + b_ih
    preact = h @ w_hh.T + _x[:, :5 * hid]
    i, f, o, t, j = jnp.split(preact, 5, axis=1)
    i = jax.nn.sigmoid(i)
    f = jax.nn.sigmoid(f + 1.0)
    o = jax.nn.sigmoid(o)
    t = jax.nn.sigmoid(t)
    j = jnp.tanh(j)
    k = _x[:, 5 * hid:]
    c_new = f * c + i * j
    c_new = mask * c_new + (1.0 - mask) * c
    h_new = t * o * jnp.tanh(c_new) + (1.0 - t) * k
    h_new = mask * h_new + (1.0 - mask) * h
    return h_new, c_new


if __name__ == "__main__":
    B, D_IN, H = 8, 64, 32

    key = jax.random.PRNGKey(0)
    kx, kh, kc, km, kw1, kw2 = jax.random.split(key, 6)

    x = jax.random.normal(kx, (B, D_IN), dtype=jnp.float32)
    h0 = jax.random.normal(kh, (B, H), dtype=jnp.float32)
    c0 = jax.random.normal(kc, (B, H), dtype=jnp.float32)
    # mask in {0, 1}, shape [B, 1] (per-timestep sequence mask)
    mask = (jax.random.uniform(km, (B, 1)) > 0.3).astype(jnp.float32)

    # Deterministic synthetic parameters (module uses block-orthonormal init;
    # plain scaled normals here — shapes match the nn.Linear layouts).
    w_ih = jax.random.normal(kw1, (6 * H, D_IN), dtype=jnp.float32) * 0.1
    b_ih = jnp.zeros((6 * H,), dtype=jnp.float32)
    w_hh = jax.random.normal(kw2, (5 * H, H), dtype=jnp.float32) * 0.1

    h_ref, c_ref = _reference(x, mask, h0, c0, w_ih, b_ih, w_hh)

    # 1) f32-fed MXU: matches the f32 reference tightly.
    w32, b32 = pack_highway_lstm_params(w_ih, b_ih, w_hh, mxu_dtype=jnp.float32)
    h1, c1 = highway_lstm_cell(x, mask, h0, c0, w32, b32)
    jax.block_until_ready((h1, c1))
    assert jnp.allclose(h1, h_ref, atol=1e-4, rtol=1e-4)
    assert jnp.allclose(c1, c_ref, atol=1e-4, rtol=1e-4)

    # 2) bf16-fed MXU weights (recommended on all generations): f32 gate math
    #    and accumulation; tolerance reflects bf16 weight rounding only.
    wbf, bbf = pack_highway_lstm_params(w_ih, b_ih, w_hh, mxu_dtype=jnp.bfloat16)
    h2, c2 = highway_lstm_cell(x, mask, h0, c0, wbf, bbf)
    jax.block_until_ready((h2, c2))
    assert jnp.allclose(h2, h_ref, atol=3e-2, rtol=3e-2)
    assert jnp.allclose(c2, c_ref, atol=3e-2, rtol=3e-2)

    # 3) bf16 activation streaming (HBM-bound regime for small/medium H):
    #    x/h and the h output travel as bf16, c stays f32 end-to-end.
    h3, c3 = highway_lstm_cell(x, mask, h0, c0, wbf, bbf,
                               activation_dtype=jnp.bfloat16)
    jax.block_until_ready((h3, c3))
    assert c3.dtype == jnp.float32
    assert jnp.allclose(h3.astype(jnp.float32), h_ref, atol=1e-1, rtol=1e-1)
    assert jnp.allclose(c3, c_ref, atol=1e-1, rtol=1e-1)

    print("KERNEL_OK")
</pallas_src>

<mosaic_0001>
module attributes {stable_mosaic.version = 11 : i64} {
  func.func @_highway_lstm_kernel(%arg0: i32, %arg1: memref<16x128xf32, #tpu.memory_space<vmem>>, %arg2: memref<16x128xf32, #tpu.memory_space<vmem>>, %arg3: memref<16x128xf32, #tpu.memory_space<vmem>>, %arg4: memref<16x1xf32, #tpu.memory_space<vmem>>, %arg5: memref<256x768xf32, #tpu.memory_space<vmem>>, %arg6: memref<1x768xf32, #tpu.memory_space<vmem>>, %arg7: memref<16x128xf32, #tpu.memory_space<vmem>>, %arg8: memref<16x128xf32, #tpu.memory_space<vmem>>) attributes {dimension_semantics = [#tpu.dimension_semantics<parallel>], iteration_bounds = array<i64: 1>, scalar_prefetch = 0 : i64, scratch_operands = 0 : i64, tpu.core_type = #tpu.core_type<tc>, window_params = [{transform_indices = @transform_0, window_bounds = array<i64: 16, 128>}, {transform_indices = @transform_1, window_bounds = array<i64: 16, 128>}, {transform_indices = @transform_2, window_bounds = array<i64: 16, 128>}, {transform_indices = @transform_3, window_bounds = array<i64: 16, 1>}, {pipeline_mode = #tpu.pipeline_mode<synchronous>, transform_indices = @transform_4, window_bounds = array<i64: 256, 768>}, {pipeline_mode = #tpu.pipeline_mode<synchronous>, transform_indices = @transform_5, window_bounds = array<i64: 1, 768>}, {transform_indices = @transform_6, window_bounds = array<i64: 16, 128>}, {transform_indices = @transform_7, window_bounds = array<i64: 16, 128>}]} {
    %c0 = arith.constant 0 : index
    %c0_0 = arith.constant 0 : index
    %0 = vector.load %arg1[%c0, %c0_0] : memref<16x128xf32, #tpu.memory_space<vmem>>, vector<16x128xf32>
    %c0_1 = arith.constant 0 : index
    %c0_2 = arith.constant 0 : index
    %1 = vector.load %arg2[%c0_1, %c0_2] : memref<16x128xf32, #tpu.memory_space<vmem>>, vector<16x128xf32>
    %c0_3 = arith.constant 0 : index
    %c0_4 = arith.constant 0 : index
    %2 = vector.load %arg5[%c0_3, %c0_4] : memref<256x768xf32, #tpu.memory_space<vmem>>, vector<128x768xf32>
    %cst = arith.constant dense<0.000000e+00> : vector<16x768xf32>
    %3 = tpu.matmul %0, %2, %cst {dimension_numbers = #tpu.dot_dimension_numbers<[1], [0], [0], [1], [0, 0, 1, 1], [], []>} : vector<16x128xf32>, vector<128x768xf32>, vector<16x768xf32> -> vector<16x768xf32>
    %c128 = arith.constant 128 : index
    %c0_5 = arith.constant 0 : index
    %4 = vector.load %arg5[%c128, %c0_5] : memref<256x768xf32, #tpu.memory_space<vmem>>, vector<128x768xf32>
    %cst_6 = arith.constant dense<0.000000e+00> : vector<16x768xf32>
    %5 = tpu.matmul %1, %4, %cst_6 {dimension_numbers = #tpu.dot_dimension_numbers<[1], [0], [0], [1], [0, 0, 1, 1], [], []>} : vector<16x128xf32>, vector<128x768xf32>, vector<16x768xf32> -> vector<16x768xf32>
    %6 = arith.addf %3, %5 : vector<16x768xf32>
    %c0_7 = arith.constant 0 : index
    %c0_8 = arith.constant 0 : index
    %7 = vector.load %arg6[%c0_7, %c0_8] : memref<1x768xf32, #tpu.memory_space<vmem>>, vector<1x768xf32>
    %8 = vector.broadcast %7 : vector<1x768xf32> to vector<16x768xf32>
    %9 = arith.addf %6, %8 : vector<16x768xf32>
    %10 = vector.extract_strided_slice %9 {offsets = [0, 0], sizes = [16, 128], strides = [1, 1]} : vector<16x768xf32> to vector<16x128xf32>
    %11 = math.tanh %10 : vector<16x128xf32>
    %cst_9 = arith.constant 5.000000e-01 : f32
    %12 = vector.broadcast %cst_9 : f32 to vector<16x128xf32>
    %13 = arith.mulf %12, %11 : vector<16x128xf32>
    %cst_10 = arith.constant 5.000000e-01 : f32
    %14 = vector.broadcast %cst_10 : f32 to vector<16x128xf32>
    %15 = arith.addf %13, %14 : vector<16x128xf32>
    %16 = vector.extract_strided_slice %9 {offsets = [0, 128], sizes = [16, 128], strides = [1, 1]} : vector<16x768xf32> to vector<16x128xf32>
    %17 = math.tanh %16 : vector<16x128xf32>
    %cst_11 = arith.constant 5.000000e-01 : f32
    %18 = vector.broadcast %cst_11 : f32 to vector<16x128xf32>
    %19 = arith.mulf %18, %17 : vector<16x128xf32>
    %cst_12 = arith.constant 5.000000e-01 : f32
    %20 = vector.broadcast %cst_12 : f32 to vector<16x128xf32>
    %21 = arith.addf %19, %20 : vector<16x128xf32>
    %22 = vector.extract_strided_slice %9 {offsets = [0, 256], sizes = [16, 128], strides = [1, 1]} : vector<16x768xf32> to vector<16x128xf32>
    %23 = math.tanh %22 : vector<16x128xf32>
    %cst_13 = arith.constant 5.000000e-01 : f32
    %24 = vector.broadcast %cst_13 : f32 to vector<16x128xf32>
    %25 = arith.mulf %24, %23 : vector<16x128xf32>
    %cst_14 = arith.constant 5.000000e-01 : f32
    %26 = vector.broadcast %cst_14 : f32 to vector<16x128xf32>
    %27 = arith.addf %25, %26 : vector<16x128xf32>
    %28 = vector.extract_strided_slice %9 {offsets = [0, 384], sizes = [16, 128], strides = [1, 1]} : vector<16x768xf32> to vector<16x128xf32>
    %29 = math.tanh %28 : vector<16x128xf32>
    %cst_15 = arith.constant 5.000000e-01 : f32
    %30 = vector.broadcast %cst_15 : f32 to vector<16x128xf32>
    %31 = arith.mulf %30, %29 : vector<16x128xf32>
    %cst_16 = arith.constant 5.000000e-01 : f32
    %32 = vector.broadcast %cst_16 : f32 to vector<16x128xf32>
    %33 = arith.addf %31, %32 : vector<16x128xf32>
    %34 = vector.extract_strided_slice %9 {offsets = [0, 512], sizes = [16, 128], strides = [1, 1]} : vector<16x768xf32> to vector<16x128xf32>
    %35 = math.tanh %34 : vector<16x128xf32>
    %36 = vector.extract_strided_slice %9 {offsets = [0, 640], sizes = [16, 128], strides = [1, 1]} : vector<16x768xf32> to vector<16x128xf32>
    %c0_17 = arith.constant 0 : index
    %c0_18 = arith.constant 0 : index
    %37 = vector.load %arg3[%c0_17, %c0_18] : memref<16x128xf32, #tpu.memory_space<vmem>>, vector<16x128xf32>
    %c0_19 = arith.constant 0 : index
    %c0_20 = arith.constant 0 : index
    %38 = vector.load %arg4[%c0_19, %c0_20] : memref<16x1xf32, #tpu.memory_space<vmem>>, vector<16x1xf32>
    %39 = vector.shape_cast %38 : vector<16x1xf32> to vector<16x1xf32>
    %40 = vector.broadcast %39 : vector<16x1xf32> to vector<16x128xf32>
    %41 = arith.mulf %21, %37 : vector<16x128xf32>
    %42 = arith.mulf %15, %35 : vector<16x128xf32>
    %43 = arith.addf %41, %42 : vector<16x128xf32>
    %44 = arith.subf %43, %37 : vector<16x128xf32>
    %45 = arith.mulf %40, %44 : vector<16x128xf32>
    %46 = arith.addf %37, %45 : vector<16x128xf32>
    %47 = arith.mulf %33, %27 : vector<16x128xf32>
    %48 = math.tanh %46 : vector<16x128xf32>
    %49 = arith.mulf %47, %48 : vector<16x128xf32>
    %cst_21 = arith.constant 1.000000e+00 : f32
    %50 = vector.broadcast %cst_21 : f32 to vector<16x128xf32>
    %51 = arith.subf %50, %33 : vector<16x128xf32>
    %52 = arith.mulf %51, %36 : vector<16x128xf32>
    %53 = arith.addf %49, %52 : vector<16x128xf32>
    %54 = arith.subf %53, %1 : vector<16x128xf32>
    %55 = arith.mulf %40, %54 : vector<16x128xf32>
    %56 = arith.addf %1, %55 : vector<16x128xf32>
    %c0_22 = arith.constant 0 : index
    %c0_23 = arith.constant 0 : index
    %57 = vector.load %arg7[%c0_22, %c0_23] : memref<16x128xf32, #tpu.memory_space<vmem>>, vector<16x128xf32>
    tpu.vector_store %arg7[%c0_22, %c0_23], %56 {strides = array<i32>} : memref<16x128xf32, #tpu.memory_space<vmem>>, vector<16x128xf32>,
    %c0_24 = arith.constant 0 : index
    %c0_25 = arith.constant 0 : index
    %58 = vector.load %arg8[%c0_24, %c0_25] : memref<16x128xf32, #tpu.memory_space<vmem>>, vector<16x128xf32>
    tpu.vector_store %arg8[%c0_24, %c0_25], %46 {strides = array<i32>} : memref<16x128xf32, #tpu.memory_space<vmem>>, vector<16x128xf32>,
    return
  }
  func.func @transform_0(%arg0: i32) -> (i32, i32) {
    %c0_i32 = arith.constant 0 : i32
    %c0_i32_0 = arith.constant 0 : i32
    return %arg0, %c0_i32 : i32, i32
  }
  func.func @transform_1(%arg0: i32) -> (i32, i32) {
    %c0_i32 = arith.constant 0 : i32
    %c0_i32_0 = arith.constant 0 : i32
    return %arg0, %c0_i32 : i32, i32
  }
  func.func @transform_2(%arg0: i32) -> (i32, i32) {
    %c0_i32 = arith.constant 0 : i32
    %c0_i32_0 = arith.constant 0 : i32
    return %arg0, %c0_i32 : i32, i32
  }
  func.func @transform_3(%arg0: i32) -> (i32, i32) {
    %c0_i32 = arith.constant 0 : i32
    %c0_i32_0 = arith.constant 0 : i32
    return %arg0, %c0_i32 : i32, i32
  }
  func.func @transform_4(%arg0: i32) -> (i32, i32) {
    %c0_i32 = arith.constant 0 : i32
    %c0_i32_0 = arith.constant 0 : i32
    %c0_i32_1 = arith.constant 0 : i32
    return %c0_i32, %c0_i32_0 : i32, i32
  }
  func.func @transform_5(%arg0: i32) -> (i32, i32) {
    %c0_i32 = arith.constant 0 : i32
    %c0_i32_0 = arith.constant 0 : i32
    %c0_i32_1 = arith.constant 0 : i32
    return %c0_i32, %c0_i32_0 : i32, i32
  }
  func.func @transform_6(%arg0: i32) -> (i32, i32) {
    %c0_i32 = arith.constant 0 : i32
    %c0_i32_0 = arith.constant 0 : i32
    return %arg0, %c0_i32 : i32, i32
  }
  func.func @transform_7(%arg0: i32) -> (i32, i32) {
    %c0_i32 = arith.constant 0 : i32
    %c0_i32_0 = arith.constant 0 : i32
    return %arg0, %c0_i32 : i32, i32
  }
}

module attributes {stable_mosaic.version = 11 : i64} {
  func.func @_highway_lstm_kernel(%arg0: i32, %arg1: memref<16x128xf32, #tpu.memory_space<vmem>>, %arg2: memref<16x128xf32, #tpu.memory_space<vmem>>, %arg3: memref<16x128xf32, #tpu.memory_space<vmem>>, %arg4: memref<16x1xf32, #tpu.memory_space<vmem>>, %arg5: memref<256x768xf32, #tpu.memory_space<vmem>>, %arg6: memref<1x768xf32, #tpu.memory_space<vmem>>, %arg7: memref<16x128xf32, #tpu.memory_space<vmem>>, %arg8: memref<16x128xf32, #tpu.memory_space<vmem>>) attributes {dimension_semantics = [#tpu.dimension_semantics<parallel>], iteration_bounds = array<i64: 1>, scalar_prefetch = 0 : i64, scratch_operands = 0 : i64, tpu.core_type = #tpu.core_type<tc>, window_params = [{transform_indices = @transform_0, window_bounds = array<i64: 16, 128>}, {transform_indices = @transform_1, window_bounds = array<i64: 16, 128>}, {transform_indices = @transform_2, window_bounds = array<i64: 16, 128>}, {transform_indices = @transform_3, window_bounds = array<i64: 16, 1>}, {pipeline_mode = #tpu.pipeline_mode<synchronous>, transform_indices = @transform_4, window_bounds = array<i64: 256, 768>}, {pipeline_mode = #tpu.pipeline_mode<synchronous>, transform_indices = @transform_5, window_bounds = array<i64: 1, 768>}, {transform_indices = @transform_6, window_bounds = array<i64: 16, 128>}, {transform_indices = @transform_7, window_bounds = array<i64: 16, 128>}]} {
    %c0 = arith.constant 0 : index
    %c0_0 = arith.constant 0 : index
    %0 = vector.load %arg1[%c0, %c0_0] : memref<16x128xf32, #tpu.memory_space<vmem>>, vector<16x128xf32>
    %c0_1 = arith.constant 0 : index
    %c0_2 = arith.constant 0 : index
    %1 = vector.load %arg2[%c0_1, %c0_2] : memref<16x128xf32, #tpu.memory_space<vmem>>, vector<16x128xf32>
    %c0_3 = arith.constant 0 : index
    %c0_4 = arith.constant 0 : index
    %2 = vector.load %arg5[%c0_3, %c0_4] : memref<256x768xf32, #tpu.memory_space<vmem>>, vector<128x768xf32>
    %cst = arith.constant dense<0.000000e+00> : vector<16x768xf32>
    %3 = tpu.matmul %0, %2, %cst {dimension_numbers = #tpu.dot_dimension_numbers<[1], [0], [0], [1], [0, 0, 1, 1], [], []>} : vector<16x128xf32>, vector<128x768xf32>, vector<16x768xf32> -> vector<16x768xf32>
    %c128 = arith.constant 128 : index
    %c0_5 = arith.constant 0 : index
    %4 = vector.load %arg5[%c128, %c0_5] : memref<256x768xf32, #tpu.memory_space<vmem>>, vector<128x768xf32>
    %cst_6 = arith.constant dense<0.000000e+00> : vector<16x768xf32>
    %5 = tpu.matmul %1, %4, %cst_6 {dimension_numbers = #tpu.dot_dimension_numbers<[1], [0], [0], [1], [0, 0, 1, 1], [], []>} : vector<16x128xf32>, vector<128x768xf32>, vector<16x768xf32> -> vector<16x768xf32>
    %6 = arith.addf %3, %5 : vector<16x768xf32>
    %c0_7 = arith.constant 0 : index
    %c0_8 = arith.constant 0 : index
    %7 = vector.load %arg6[%c0_7, %c0_8] : memref<1x768xf32, #tpu.memory_space<vmem>>, vector<1x768xf32>
    %8 = vector.broadcast %7 : vector<1x768xf32> to vector<16x768xf32>
    %9 = arith.addf %6, %8 : vector<16x768xf32>
    %10 = vector.extract_strided_slice %9 {offsets = [0, 0], sizes = [16, 128], strides = [1, 1]} : vector<16x768xf32> to vector<16x128xf32>
    %11 = math.tanh %10 : vector<16x128xf32>
    %cst_9 = arith.constant 5.000000e-01 : f32
    %12 = vector.broadcast %cst_9 : f32 to vector<16x128xf32>
    %13 = arith.mulf %12, %11 : vector<16x128xf32>
    %cst_10 = arith.constant 5.000000e-01 : f32
    %14 = vector.broadcast %cst_10 : f32 to vector<16x128xf32>
    %15 = arith.addf %13, %14 : vector<16x128xf32>
    %16 = vector.extract_strided_slice %9 {offsets = [0, 128], sizes = [16, 128], strides = [1, 1]} : vector<16x768xf32> to vector<16x128xf32>
    %17 = math.tanh %16 : vector<16x128xf32>
    %cst_11 = arith.constant 5.000000e-01 : f32
    %18 = vector.broadcast %cst_11 : f32 to vector<16x128xf32>
    %19 = arith.mulf %18, %17 : vector<16x128xf32>
    %cst_12 = arith.constant 5.000000e-01 : f32
    %20 = vector.broadcast %cst_12 : f32 to vector<16x128xf32>
    %21 = arith.addf %19, %20 : vector<16x128xf32>
    %22 = vector.extract_strided_slice %9 {offsets = [0, 256], sizes = [16, 128], strides = [1, 1]} : vector<16x768xf32> to vector<16x128xf32>
    %23 = math.tanh %22 : vector<16x128xf32>
    %cst_13 = arith.constant 5.000000e-01 : f32
    %24 = vector.broadcast %cst_13 : f32 to vector<16x128xf32>
    %25 = arith.mulf %24, %23 : vector<16x128xf32>
    %cst_14 = arith.constant 5.000000e-01 : f32
    %26 = vector.broadcast %cst_14 : f32 to vector<16x128xf32>
    %27 = arith.addf %25, %26 : vector<16x128xf32>
    %28 = vector.extract_strided_slice %9 {offsets = [0, 384], sizes = [16, 128], strides = [1, 1]} : vector<16x768xf32> to vector<16x128xf32>
    %29 = math.tanh %28 : vector<16x128xf32>
    %cst_15 = arith.constant 5.000000e-01 : f32
    %30 = vector.broadcast %cst_15 : f32 to vector<16x128xf32>
    %31 = arith.mulf %30, %29 : vector<16x128xf32>
    %cst_16 = arith.constant 5.000000e-01 : f32
    %32 = vector.broadcast %cst_16 : f32 to vector<16x128xf32>
    %33 = arith.addf %31, %32 : vector<16x128xf32>
    %34 = vector.extract_strided_slice %9 {offsets = [0, 512], sizes = [16, 128], strides = [1, 1]} : vector<16x768xf32> to vector<16x128xf32>
    %35 = math.tanh %34 : vector<16x128xf32>
    %36 = vector.extract_strided_slice %9 {offsets = [0, 640], sizes = [16, 128], strides = [1, 1]} : vector<16x768xf32> to vector<16x128xf32>
    %c0_17 = arith.constant 0 : index
    %c0_18 = arith.constant 0 : index
    %37 = vector.load %arg3[%c0_17, %c0_18] : memref<16x128xf32, #tpu.memory_space<vmem>>, vector<16x128xf32>
    %c0_19 = arith.constant 0 : index
    %c0_20 = arith.constant 0 : index
    %38 = vector.load %arg4[%c0_19, %c0_20] : memref<16x1xf32, #tpu.memory_space<vmem>>, vector<16x1xf32>
    %39 = vector.shape_cast %38 : vector<16x1xf32> to vector<16x1xf32>
    %40 = vector.broadcast %39 : vector<16x1xf32> to vector<16x128xf32>
    %41 = arith.mulf %21, %37 : vector<16x128xf32>
    %42 = arith.mulf %15, %35 : vector<16x128xf32>
    %43 = arith.addf %41, %42 : vector<16x128xf32>
    %44 = arith.subf %43, %37 : vector<16x128xf32>
    %45 = arith.mulf %40, %44 : vector<16x128xf32>
    %46 = arith.addf %37, %45 : vector<16x128xf32>
    %47 = arith.mulf %33, %27 : vector<16x128xf32>
    %48 = math.tanh %46 : vector<16x128xf32>
    %49 = arith.mulf %47, %48 : vector<16x128xf32>
    %cst_21 = arith.constant 1.000000e+00 : f32
    %50 = vector.broadcast %cst_21 : f32 to vector<16x128xf32>
    %51 = arith.subf %50, %33 : vector<16x128xf32>
    %52 = arith.mulf %51, %36 : vector<16x128xf32>
    %53 = arith.addf %49, %52 : vector<16x128xf32>
    %54 = arith.subf %53, %1 : vector<16x128xf32>
    %55 = arith.mulf %40, %54 : vector<16x128xf32>
    %56 = arith.addf %1, %55 : vector<16x128xf32>
    %c0_22 = arith.constant 0 : index
    %c0_23 = arith.constant 0 : index
    %57 = vector.load %arg7[%c0_22, %c0_23] : memref<16x128xf32, #tpu.memory_space<vmem>>, vector<16x128xf32>
    tpu.vector_store %arg7[%c0_22, %c0_23], %56 {strides = array<i32>} : memref<16x128xf32, #tpu.memory_space<vmem>>, vector<16x128xf32>,
    %c0_24 = arith.constant 0 : index
    %c0_25 = arith.constant 0 : index
    %58 = vector.load %arg8[%c0_24, %c0_25] : memref<16x128xf32, #tpu.memory_space<vmem>>, vector<16x128xf32>
    tpu.vector_store %arg8[%c0_24, %c0_25], %46 {strides = array<i32>} : memref<16x128xf32, #tpu.memory_space<vmem>>, vector<16x128xf32>,
    return
  }
  func.func @transform_0(%arg0: i32) -> (i32, i32) {
    %c0_i32 = arith.constant 0 : i32
    %c0_i32_0 = arith.constant 0 : i32
    return %arg0, %c0_i32 : i32, i32
  }
  func.func @transform_1(%arg0: i32) -> (i32, i32) {
    %c0_i32 = arith.constant 0 : i32
    %c0_i32_0 = arith.constant 0 : i32
    return %arg0, %c0_i32 : i32, i32
  }
  func.func @transform_2(%arg0: i32) -> (i32, i32) {
    %c0_i32 = arith.constant 0 : i32
    %c0_i32_0 = arith.constant 0 : i32
    return %arg0, %c0_i32 : i32, i32
  }
  func.func @transform_3(%arg0: i32) -> (i32, i32) {
    %c0_i32 = arith.constant 0 : i32
    %c0_i32_0 = arith.constant 0 : i32
    return %arg0, %c0_i32 : i32, i32
  }
  func.func @transform_4(%arg0: i32) -> (i32, i32) {
    %c0_i32 = arith.constant 0 : i32
    %c0_i32_0 = arith.constant 0 : i32
    %c0_i32_1 = arith.constant 0 : i32
    return %c0_i32, %c0_i32_0 : i32, i32
  }
  func.func @transform_5(%arg0: i32) -> (i32, i32) {
    %c0_i32 = arith.constant 0 : i32
    %c0_i32_0 = arith.constant 0 : i32
    %c0_i32_1 = arith.constant 0 : i32
    return %c0_i32, %c0_i32_0 : i32, i32
  }
  func.func @transform_6(%arg0: i32) -> (i32, i32) {
    %c0_i32 = arith.constant 0 : i32
    %c0_i32_0 = arith.constant 0 : i32
    return %arg0, %c0_i32 : i32, i32
  }
  func.func @transform_7(%arg0: i32) -> (i32, i32) {
    %c0_i32 = arith.constant 0 : i32
    %c0_i32_0 = arith.constant 0 : i32
    return %arg0, %c0_i32 : i32, i32
  }
}

</mosaic_0001>

<llo_original>
// kernel: tpu_custom_call.1
$region0: #{tpu_custom_call.1}
  #allocation0 [shape = 'u32[]', space=smem, size = 0x4, offset = 0x4, fixed_abs, tag = 'smem constant byte address 0x4 - core index']
  #allocation1 [shape = 'u32[144,128]{1,0:T(1,128)}', space=vmem, size = 0x12000, scoped, tag = 'internal scratch']
  %s0 = inlined_call_operand.vmem [shape: f32[16,128], index: 0, kind: input, shape index: {}]
  %s1 = inlined_call_operand.hbm [shape: f32[16,128], index: 1, kind: input, shape index: {}]
  %s2 = inlined_call_operand.hbm [shape: f32[16,128], index: 2, kind: input, shape index: {}]
  %s3 = inlined_call_operand.vmem [shape: f32[16,1], index: 3, kind: input, shape index: {}]
  %s4 = inlined_call_operand.hbm [shape: f32[256,768], index: 4, kind: input, shape index: {}]
  %s5 = inlined_call_operand.vmem [shape: f32[1,768], index: 5, kind: input, shape index: {}]
  %s6 = inlined_call_operand.hbm [shape: f32[16,128], index: 6, kind: output, shape index: {0}]
  %s7 = inlined_call_operand.hbm [shape: f32[16,128], index: 7, kind: output, shape index: {1}]
  %8 = xla_tuple %s6, %s7
  %s9 = sld [smem:[#allocation0]]
  $region54: #{tpu_custom_call.1} parent=0
    _
  %s11 = ssub.s32 1, %s9
  %s12 = scalar_select 0, %s11, %s9
  $region1: #{tpu_custom_call.1} parent=0
    #allocation2 [shape = 'u8[8192]{0}', space=vmem, size = 0x2000, scoped, tag = 'input window, operand 1, single buffered']
    #allocation3 [shape = 's32[1]{0}', space=sflag, size = 0x4, scoped, tag = 'scoped memory for tpu_custom_call.1']
    #allocation4 [shape = 's32[1]{0}', space=sflag, size = 0x4, scoped, tag = 'scoped memory for tpu_custom_call.1']
    #allocation5 [shape = 'u8[8192]{0}', space=vmem, size = 0x2000, scoped, tag = 'input window, operand 2, single buffered']
    #allocation6 [shape = 's32[1]{0}', space=sflag, size = 0x4, scoped, tag = 'scoped memory for tpu_custom_call.1']
    #allocation7 [shape = 'u8[786432]{0}', space=vmem, size = 0xc0000, scoped, tag = 'input window, operand 4, single buffered']
    #allocation8 [shape = 'u8[8192]{0}', space=vmem, size = 0x2000, scoped, tag = 'output window, operand 0, single buffered']
    #allocation9 [shape = 'u8[8192]{0}', space=vmem, size = 0x2000, scoped, tag = 'output window, operand 1, single buffered']
    #allocation10 [shape = 's32[1]{0}', space=sflag, size = 0x4, scoped, tag = 'scoped memory for tpu_custom_call.1']
    %13 = vsyncpa [#allocation3], 0
    %14 = vsyncpa [#allocation6], 0
    %15 = vsyncpa [#allocation4], 0
    %16 = vsyncpa [#allocation10], 0
    // Predicated region
    $region2: #{tpu_custom_call.1} parent=1 // pred_check
      _
    $region3: #{tpu_custom_call.1} parent=1 // pred_check_branch
      %18 = sbr.rel (0) target = $region5
    $region4: #{tpu_custom_call.1} parent=1 // pred_region
      _
    $region5: #{tpu_custom_call.1} parent=1 // pred_fallthru
      _
    // Predicated region
    $region6: #{tpu_custom_call.1} parent=1 // pred_check
      _
    $region7: #{tpu_custom_call.1} parent=1 // pred_check_branch
      %20 = sbr.rel (0) target = $region9
    $region8: #{tpu_custom_call.1} parent=1 // pred_region
      %s22 = ssub.s32 256, 256
      %23 = vsyncadd [#allocation3], %s22
      %s24 = sshll.u32 [#allocation2], 4
      %s25 = int_to_ptr.vmem [resolvable:$true] %s24
      %30 = dma.hbm_to_vmem [thread:$0]  %s1, 256, %s25, [#allocation3], 128, 128, 8
    $region9: #{tpu_custom_call.1} parent=1 // pred_fallthru
      _
    // Predicated region
    $region10: #{tpu_custom_call.1} parent=1 // pred_check
      _
    $region11: #{tpu_custom_call.1} parent=1 // pred_check_branch
      %32 = sbr.rel (0) target = $region13
    $region12: #{tpu_custom_call.1} parent=1 // pred_region
      %s34 = ssub.s32 256, 256
      %35 = vsyncadd [#allocation6], %s34
      %s36 = sshll.u32 [#allocation5], 4
      %s37 = int_to_ptr.vmem [resolvable:$true] %s36
      %42 = dma.hbm_to_vmem [thread:$0]  %s2, 256, %s37, [#allocation6], 128, 128, 8
    $region13: #{tpu_custom_call.1} parent=1 // pred_fallthru
      _
    // Predicated region
    $region14: #{tpu_custom_call.1} parent=1 // pred_check
      _
    $region15: #{tpu_custom_call.1} parent=1 // pred_check_branch
      %44 = sbr.rel (0) target = $region17
    $region16: #{tpu_custom_call.1} parent=1 // pred_region
      _
    $region17: #{tpu_custom_call.1} parent=1 // pred_fallthru
      _
    // Predicated region
    $region18: #{tpu_custom_call.1} parent=1 // pred_check
      _
    $region19: #{tpu_custom_call.1} parent=1 // pred_check_branch
      %46 = sbr.rel (0) target = $region21
    $region20: #{tpu_custom_call.1} parent=1 // pred_region
      %s48 = ssub.s32 24576, 24576
      %49 = vsyncadd [#allocation6], %s48
      %s50 = sshll.u32 [#allocation7], 4
      %s51 = int_to_ptr.vmem [resolvable:$true] %s50
      %56 = dma.hbm_to_vmem [thread:$0]  %s4, 24576, %s51, [#allocation6], 768, 768, 48
    $region21: #{tpu_custom_call.1} parent=1 // pred_fallthru
      _
    // Predicated region
    $region22: #{tpu_custom_call.1} parent=1 // pred_check
      _
    $region23: #{tpu_custom_call.1} parent=1 // pred_check_branch
      %58 = sbr.rel (0) target = $region25
    $region24: #{tpu_custom_call.1} parent=1 // pred_region
      _
    $region25: #{tpu_custom_call.1} parent=1 // pred_fallthru
      _
    // Predicated region
    $region26: #{tpu_custom_call.1} parent=1 // pred_check
      _
    $region27: #{tpu_custom_call.1} parent=1 // pred_check_branch
      %60 = sbr.rel (0) target = $region29
    $region28: #{tpu_custom_call.1} parent=1 // pred_region
      %61 = dma.done [#allocation3], 256
    $region29: #{tpu_custom_call.1} parent=1 // pred_fallthru
      _
    // Predicated region
    $region30: #{tpu_custom_call.1} parent=1 // pred_check
      _
    $region31: #{tpu_custom_call.1} parent=1 // pred_check_branch
      %63 = sbr.rel (0) target = $region33
    $region32: #{tpu_custom_call.1} parent=1 // pred_region
      %64 = dma.done [#allocation6], 256
    $region33: #{tpu_custom_call.1} parent=1 // pred_fallthru
      _
    // Predicated region
    $region34: #{tpu_custom_call.1} parent=1 // pred_check
      _
    $region35: #{tpu_custom_call.1} parent=1 // pred_check_branch
      %66 = sbr.rel (0) target = $region37
    $region36: #{tpu_custom_call.1} parent=1 // pred_region
      %67 = dma.done [#allocation6], 24576
    $region37: #{tpu_custom_call.1} parent=1 // pred_fallthru
      _
    %v68 = vld [vmem:[%s0] sm:$0xff]
    %v69 = vld [vmem:[%s0 + $0x8] sm:$0xff]
    %v70 = vld [vmem:[#allocation2] sm:$0xff]
    %v71 = vld [vmem:[#allocation2 + $0x8] sm:$0xff]
    %v72 = vld [vmem:[#allocation7] sm:$0xff]
    %v73 = vld [vmem:[#allocation7 + $0x8] sm:$0xff]
    %v74 = vld [vmem:[#allocation7 + $0x10] sm:$0xff]
    %v75 = vld [vmem:[#allocation7 + $0x18] sm:$0xff]
    %v76 = vld [vmem:[#allocation7 + $0x20] sm:$0xff]
    %v77 = vld [vmem:[#allocation7 + $0x28] sm:$0xff]
    %v78 = vld [vmem:[#allocation7 + $0x30] sm:$0xff]
    %v79 = vld [vmem:[#allocation7 + $0x38] sm:$0xff]
    %v80 = vld [vmem:[#allocation7 + $0x40] sm:$0xff]
    %v81 = vld [vmem:[#allocation7 + $0x48] sm:$0xff]
    %v82 = vld [vmem:[#allocation7 + $0x50] sm:$0xff]
    %v83 = vld [vmem:[#allocation7 + $0x58] sm:$0xff]
    %v84 = vld [vmem:[#allocation7 + $0x60] sm:$0xff]
    %v85 = vld [vmem:[#allocation7 + $0x68] sm:$0xff]
    %v86 = vld [vmem:[#allocation7 + $0x70] sm:$0xff]
    %v87 = vld [vmem:[#allocation7 + $0x78] sm:$0xff]
    %v88 = vld [vmem:[#allocation7 + $0x80] sm:$0xff]
    %v89 = vld [vmem:[#allocation7 + $0x88] sm:$0xff]
    %v90 = vld [vmem:[#allocation7 + $0x90] sm:$0xff]
    %v91 = vld [vmem:[#allocation7 + $0x98] sm:$0xff]
    %v92 = vld [vmem:[#allocation7 + $0xa0] sm:$0xff]
    %v93 = vld [vmem:[#allocation7 + $0xa8] sm:$0xff]
    %v94 = vld [vmem:[#allocation7 + $0xb0] sm:$0xff]
    %v95 = vld [vmem:[#allocation7 + $0xb8] sm:$0xff]
    %v96 = vld [vmem:[#allocation7 + $0xc0] sm:$0xff]
    %v97 = vld [vmem:[#allocation7 + $0xc8] sm:$0xff]
    %v98 = vld [vmem:[#allocation7 + $0xd0] sm:$0xff]
    %v99 = vld [vmem:[#allocation7 + $0xd8] sm:$0xff]
    %v100 = vld [vmem:[#allocation7 + $0xe0] sm:$0xff]
    %v101 = vld [vmem:[#allocation7 + $0xe8] sm:$0xff]
    %v102 = vld [vmem:[#allocation7 + $0xf0] sm:$0xff]
    %v103 = vld [vmem:[#allocation7 + $0xf8] sm:$0xff]
    %v104 = vld [vmem:[#allocation7 + $0x100] sm:$0xff]
    %v105 = vld [vmem:[#allocation7 + $0x108] sm:$0xff]
    %v106 = vld [vmem:[#allocation7 + $0x110] sm:$0xff]
    %v107 = vld [vmem:[#allocation7 + $0x118] sm:$0xff]
    %v108 = vld [vmem:[#allocation7 + $0x120] sm:$0xff]
    %v109 = vld [vmem:[#allocation7 + $0x128] sm:$0xff]
    %v110 = vld [vmem:[#allocation7 + $0x130] sm:$0xff]
    %v111 = vld [vmem:[#allocation7 + $0x138] sm:$0xff]
    %v112 = vld [vmem:[#allocation7 + $0x140] sm:$0xff]
    %v113 = vld [vmem:[#allocation7 + $0x148] sm:$0xff]
    %v114 = vld [vmem:[#allocation7 + $0x150] sm:$0xff]
    %v115 = vld [vmem:[#allocation7 + $0x158] sm:$0xff]
    %v116 = vld [vmem:[#allocation7 + $0x160] sm:$0xff]
    %v117 = vld [vmem:[#allocation7 + $0x168] sm:$0xff]
    %v118 = vld [vmem:[#allocation7 + $0x170] sm:$0xff]
    %v119 = vld [vmem:[#allocation7 + $0x178] sm:$0xff]
    %v120 = vld [vmem:[#allocation7 + $0x180] sm:$0xff]
    %v121 = vld [vmem:[#allocation7 + $0x188] sm:$0xff]
    %v122 = vld [vmem:[#allocation7 + $0x190] sm:$0xff]
    %v123 = vld [vmem:[#allocation7 + $0x198] sm:$0xff]
    %v124 = vld [vmem:[#allocation7 + $0x1a0] sm:$0xff]
    %v125 = vld [vmem:[#allocation7 + $0x1a8] sm:$0xff]
    %v126 = vld [vmem:[#allocation7 + $0x1b0] sm:$0xff]
    %v127 = vld [vmem:[#allocation7 + $0x1b8] sm:$0xff]
    %v128 = vld [vmem:[#allocation7 + $0x1c0] sm:$0xff]
    %v129 = vld [vmem:[#allocation7 + $0x1c8] sm:$0xff]
    %v130 = vld [vmem:[#allocation7 + $0x1d0] sm:$0xff]
    %v131 = vld [vmem:[#allocation7 + $0x1d8] sm:$0xff]
    %v132 = vld [vmem:[#allocation7 + $0x1e0] sm:$0xff]
    %v133 = vld [vmem:[#allocation7 + $0x1e8] sm:$0xff]
    %v134 = vld [vmem:[#allocation7 + $0x1f0] sm:$0xff]
    %v135 = vld [vmem:[#allocation7 + $0x1f8] sm:$0xff]
    %v136 = vld [vmem:[#allocation7 + $0x200] sm:$0xff]
    %v137 = vld [vmem:[#allocation7 + $0x208] sm:$0xff]
    %v138 = vld [vmem:[#allocation7 + $0x210] sm:$0xff]
    %v139 = vld [vmem:[#allocation7 + $0x218] sm:$0xff]
    %v140 = vld [vmem:[#allocation7 + $0x220] sm:$0xff]
    %v141 = vld [vmem:[#allocation7 + $0x228] sm:$0xff]
    %v142 = vld [vmem:[#allocation7 + $0x230] sm:$0xff]
    %v143 = vld [vmem:[#allocation7 + $0x238] sm:$0xff]
    %v144 = vld [vmem:[#allocation7 + $0x240] sm:$0xff]
    %v145 = vld [vmem:[#allocation7 + $0x248] sm:$0xff]
    %v146 = vld [vmem:[#allocation7 + $0x250] sm:$0xff]
    %v147 = vld [vmem:[#allocation7 + $0x258] sm:$0xff]
    %v148 = vld [vmem:[#allocation7 + $0x260] sm:$0xff]
    %v149 = vld [vmem:[#allocation7 + $0x268] sm:$0xff]
    %v150 = vld [vmem:[#allocation7 + $0x270] sm:$0xff]
    %v151 = vld [vmem:[#allocation7 + $0x278] sm:$0xff]
    %v152 = vld [vmem:[#allocation7 + $0x280] sm:$0xff]
    %v153 = vld [vmem:[#allocation7 + $0x288] sm:$0xff]
    %v154 = vld [vmem:[#allocation7 + $0x290] sm:$0xff]
    %v155 = vld [vmem:[#allocation7 + $0x298] sm:$0xff]
    %v156 = vld [vmem:[#allocation7 + $0x2a0] sm:$0xff]
    %v157 = vld [vmem:[#allocation7 + $0x2a8] sm:$0xff]
    %v158 = vld [vmem:[#allocation7 + $0x2b0] sm:$0xff]
    %v159 = vld [vmem:[#allocation7 + $0x2b8] sm:$0xff]
    %v160 = vld [vmem:[#allocation7 + $0x2c0] sm:$0xff]
    %v161 = vld [vmem:[#allocation7 + $0x2c8] sm:$0xff]
    %v162 = vld [vmem:[#allocation7 + $0x2d0] sm:$0xff]
    %v163 = vld [vmem:[#allocation7 + $0x2d8] sm:$0xff]
    %v164 = vld [vmem:[#allocation7 + $0x2e0] sm:$0xff]
    %v165 = vld [vmem:[#allocation7 + $0x2e8] sm:$0xff]
    %v166 = vld [vmem:[#allocation7 + $0x2f0] sm:$0xff]
    %v167 = vld [vmem:[#allocation7 + $0x2f8] sm:$0xff]
    %v168 = vld [vmem:[#allocation7 + $0x300] sm:$0xff]
    %v169 = vld [vmem:[#allocation7 + $0x308] sm:$0xff]
    %v170 = vld [vmem:[#allocation7 + $0x310] sm:$0xff]
    %v171 = vld [vmem:[#allocation7 + $0x318] sm:$0xff]
    %v172 = vld [vmem:[#allocation7 + $0x320] sm:$0xff]
    %v173 = vld [vmem:[#allocation7 + $0x328] sm:$0xff]
    %v174 = vld [vmem:[#allocation7 + $0x330] sm:$0xff]
    %v175 = vld [vmem:[#allocation7 + $0x338] sm:$0xff]
    %v176 = vld [vmem:[#allocation7 + $0x340] sm:$0xff]
    %v177 = vld [vmem:[#allocation7 + $0x348] sm:$0xff]
    %v178 = vld [vmem:[#allocation7 + $0x350] sm:$0xff]
    %v179 = vld [vmem:[#allocation7 + $0x358] sm:$0xff]
    %v180 = vld [vmem:[#allocation7 + $0x360] sm:$0xff]
    %v181 = vld [vmem:[#allocation7 + $0x368] sm:$0xff]
    %v182 = vld [vmem:[#allocation7 + $0x370] sm:$0xff]
    %v183 = vld [vmem:[#allocation7 + $0x378] sm:$0xff]
    %v184 = vld [vmem:[#allocation7 + $0x380] sm:$0xff]
    %v185 = vld [vmem:[#allocation7 + $0x388] sm:$0xff]
    %v186 = vld [vmem:[#allocation7 + $0x390] sm:$0xff]
    %v187 = vld [vmem:[#allocation7 + $0x398] sm:$0xff]
    %v188 = vld [vmem:[#allocation7 + $0x3a0] sm:$0xff]
    %v189 = vld [vmem:[#allocation7 + $0x3a8] sm:$0xff]
    %v190 = vld [vmem:[#allocation7 + $0x3b0] sm:$0xff]
    %v191 = vld [vmem:[#allocation7 + $0x3b8] sm:$0xff]
    %v192 = vld [vmem:[#allocation7 + $0x3c0] sm:$0xff]
    %v193 = vld [vmem:[#allocation7 + $0x3c8] sm:$0xff]
    %v194 = vld [vmem:[#allocation7 + $0x3d0] sm:$0xff]
    %v195 = vld [vmem:[#allocation7 + $0x3d8] sm:$0xff]
    %v196 = vld [vmem:[#allocation7 + $0x3e0] sm:$0xff]
    %v197 = vld [vmem:[#allocation7 + $0x3e8] sm:$0xff]
    %v198 = vld [vmem:[#allocation7 + $0x3f0] sm:$0xff]
    %v199 = vld [vmem:[#allocation7 + $0x3f8] sm:$0xff]
    %v200 = vld [vmem:[#allocation7 + $0x400] sm:$0xff]
    %v201 = vld [vmem:[#allocation7 + $0x408] sm:$0xff]
    %v202 = vld [vmem:[#allocation7 + $0x410] sm:$0xff]
    %v203 = vld [vmem:[#allocation7 + $0x418] sm:$0xff]
    %v204 = vld [vmem:[#allocation7 + $0x420] sm:$0xff]
    %v205 = vld [vmem:[#allocation7 + $0x428] sm:$0xff]
    %v206 = vld [vmem:[#allocation7 + $0x430] sm:$0xff]
    %v207 = vld [vmem:[#allocation7 + $0x438] sm:$0xff]
    %v208 = vld [vmem:[#allocation7 + $0x440] sm:$0xff]
    %v209 = vld [vmem:[#allocation7 + $0x448] sm:$0xff]
    %v210 = vld [vmem:[#allocation7 + $0x450] sm:$0xff]
    %v211 = vld [vmem:[#allocation7 + $0x458] sm:$0xff]
    %v212 = vld [vmem:[#allocation7 + $0x460] sm:$0xff]
    %v213 = vld [vmem:[#allocation7 + $0x468] sm:$0xff]
    %v214 = vld [vmem:[#allocation7 + $0x470] sm:$0xff]
    %v215 = vld [vmem:[#allocation7 + $0x478] sm:$0xff]
    %v216 = vld [vmem:[#allocation7 + $0x480] sm:$0xff]
    %v217 = vld [vmem:[#allocation7 + $0x488] sm:$0xff]
    %v218 = vld [vmem:[#allocation7 + $0x490] sm:$0xff]
    %v219 = vld [vmem:[#allocation7 + $0x498] sm:$0xff]
    %v220 = vld [vmem:[#allocation7 + $0x4a0] sm:$0xff]
    %v221 = vld [vmem:[#allocation7 + $0x4a8] sm:$0xff]
    %v222 = vld [vmem:[#allocation7 + $0x4b0] sm:$0xff]
    %v223 = vld [vmem:[#allocation7 + $0x4b8] sm:$0xff]
    %v224 = vld [vmem:[#allocation7 + $0x4c0] sm:$0xff]
    %v225 = vld [vmem:[#allocation7 + $0x4c8] sm:$0xff]
    %v226 = vld [vmem:[#allocation7 + $0x4d0] sm:$0xff]
    %v227 = vld [vmem:[#allocation7 + $0x4d8] sm:$0xff]
    %v228 = vld [vmem:[#allocation7 + $0x4e0] sm:$0xff]
    %v229 = vld [vmem:[#allocation7 + $0x4e8] sm:$0xff]
    %v230 = vld [vmem:[#allocation7 + $0x4f0] sm:$0xff]
    %v231 = vld [vmem:[#allocation7 + $0x4f8] sm:$0xff]
    %v232 = vld [vmem:[#allocation7 + $0x500] sm:$0xff]
    %v233 = vld [vmem:[#allocation7 + $0x508] sm:$0xff]
    %v234 = vld [vmem:[#allocation7 + $0x510] sm:$0xff]
    %v235 = vld [vmem:[#allocation7 + $0x518] sm:$0xff]
    %v236 = vld [vmem:[#allocation7 + $0x520] sm:$0xff]
    %v237 = vld [vmem:[#allocation7 + $0x528] sm:$0xff]
    %v238 = vld [vmem:[#allocation7 + $0x530] sm:$0xff]
    %v239 = vld [vmem:[#allocation7 + $0x538] sm:$0xff]
    %v240 = vld [vmem:[#allocation7 + $0x540] sm:$0xff]
    %v241 = vld [vmem:[#allocation7 + $0x548] sm:$0xff]
    %v242 = vld [vmem:[#allocation7 + $0x550] sm:$0xff]
    %v243 = vld [vmem:[#allocation7 + $0x558] sm:$0xff]
    %v244 = vld [vmem:[#allocation7 + $0x560] sm:$0xff]
    %v245 = vld [vmem:[#allocation7 + $0x568] sm:$0xff]
    %v246 = vld [vmem:[#allocation7 + $0x570] sm:$0xff]
    %v247 = vld [vmem:[#allocation7 + $0x578] sm:$0xff]
    %v248 = vld [vmem:[#allocation7 + $0x580] sm:$0xff]
    %v249 = vld [vmem:[#allocation7 + $0x588] sm:$0xff]
    %v250 = vld [vmem:[#allocation7 + $0x590] sm:$0xff]
    %v251 = vld [vmem:[#allocation7 + $0x598] sm:$0xff]
    %v252 = vld [vmem:[#allocation7 + $0x5a0] sm:$0xff]
    %v253 = vld [vmem:[#allocation7 + $0x5a8] sm:$0xff]
    %v254 = vld [vmem:[#allocation7 + $0x5b0] sm:$0xff]
    %v255 = vld [vmem:[#allocation7 + $0x5b8] sm:$0xff]
    %v256 = vld [vmem:[#allocation7 + $0x5c0] sm:$0xff]
    %v257 = vld [vmem:[#allocation7 + $0x5c8] sm:$0xff]
    %v258 = vld [vmem:[#allocation7 + $0x5d0] sm:$0xff]
    %v259 = vld [vmem:[#allocation7 + $0x5d8] sm:$0xff]
    %v260 = vld [vmem:[#allocation7 + $0x5e0] sm:$0xff]
    %v261 = vld [vmem:[#allocation7 + $0x5e8] sm:$0xff]
    %v262 = vld [vmem:[#allocation7 + $0x5f0] sm:$0xff]
    %v263 = vld [vmem:[#allocation7 + $0x5f8] sm:$0xff]
    %264 = vmatprep.subr.mxu0 %v169
    %265 = vmatpush1.msra.mxu0 %v168
    %266 = vmatprep.subr.mxu0 %v175
    %267 = vmatpush1.msra.mxu0 %v174
    %268 = vmatprep.subr.mxu0 %v181
    %269 = vmatpush1.msra.mxu0 %v180
    %270 = vmatprep.subr.mxu0 %v187
    %271 = vmatpush1.msra.mxu0 %v186
    %272 = vmatprep.subr.mxu0 %v193
    %273 = vmatpush1.msra.mxu0 %v192
    %274 = vmatprep.subr.mxu0 %v199
    %275 = vmatpush1.msra.mxu0 %v198
    %276 = vmatprep.subr.mxu0 %v205
    %277 = vmatpush1.msra.mxu0 %v204
    %278 = vmatprep.subr.mxu0 %v211
    %279 = vmatpush1.msra.mxu0 %v210
    %280 = vmatprep.subr.mxu0 %v217
    %281 = vmatpush1.msra.mxu0 %v216
    %282 = vmatprep.subr.mxu0 %v223
    %283 = vmatpush1.msra.mxu0 %v222
    %284 = vmatprep.subr.mxu0 %v229
    %285 = vmatpush1.msra.mxu0 %v228
    %286 = vmatprep.subr.mxu0 %v235
    %287 = vmatpush1.msra.mxu0 %v234
    %288 = vmatprep.subr.mxu0 %v241
    %289 = vmatpush1.msra.mxu0 %v240
    %290 = vmatprep.subr.mxu0 %v247
    %291 = vmatpush1.msra.mxu0 %v246
    %292 = vmatprep.subr.mxu0 %v253
    %293 = vmatpush1.msra.mxu0 %v252
    %294 = vmatprep.subr.mxu0 %v259
    %295 = vmatpush1.msra.mxu0 %v258
    %296 = vmatprep.subr.mxu0 0.0
    %297 = vmatpush1.msra.mxu0 0.0
    %298 = vmatprep.subr.mxu0 0.0
    %299 = vmatpush1.msra.mxu0 0.0
    %300 = vmatprep.subr.mxu0 0.0
    %301 = vmatpush1.msra.mxu0 0.0
    %302 = vmatprep.subr.mxu0 0.0
    %303 = vmatpush1.msra.mxu0 0.0
    %304 = vmatprep.subr.mxu0 0.0
    %305 = vmatpush1.msra.mxu0 0.0
    %306 = vmatprep.subr.mxu0 0.0
    %307 = vmatpush1.msra.mxu0 0.0
    %308 = vmatprep.subr.mxu0 0.0
    %309 = vmatpush1.msra.mxu0 0.0
    %310 = vmatprep.subr.mxu0 0.0
    %311 = vmatpush1.msra.mxu0 0.0
    %312 = vmatprep.subr.mxu0 0.0
    %313 = vmatpush1.msra.mxu0 0.0
    %314 = vmatprep.subr.mxu0 0.0
    %315 = vmatpush1.msra.mxu0 0.0
    %316 = vmatprep.subr.mxu0 0.0
    %317 = vmatpush1.msra.mxu0 0.0
    %318 = vmatprep.subr.mxu0 0.0
    %319 = vmatpush1.msra.mxu0 0.0
    %320 = vmatprep.subr.mxu0 0.0
    %321 = vmatpush1.msra.mxu0 0.0
    %322 = vmatprep.subr.mxu0 0.0
    %323 = vmatpush1.msra.mxu0 0.0
    %324 = vmatprep.subr.mxu0 0.0
    %325 = vmatpush1.msra.mxu0 0.0
    %326 = vmatprep.subr.mxu0 0.0
    %327 = vmatpush1.msra.mxu0 0.0
    %328 = vmatprep.mubr.f32.mxu0 0.0
    %329 = vmatmul.mubr.f32.gmra.mrb[0].mxu0 %v70
    %v330 = vpop.f32.mrb[0].mxu0
    %v331 = vadd.f32 0.0, %v330
    %v332 = vpop.f32.mrb[0].mxu0
    %v333 = vadd.f32 0.0, %v332
    %334 = vmatprep.mubr.f32.mxu0 0.0
    %335 = vmatmul.mubr.f32.gmra.mrb[0].mxu0 %v71
    %v336 = vpop.f32.mrb[0].mxu0
    %v337 = vadd.f32 0.0, %v336
    %v338 = vpop.f32.mrb[0].mxu0
    %v339 = vadd.f32 0.0, %v338
    %340 = vdwg.mxu0
    %341 = vmatprep.subr.mxu0 %v171
    %342 = vmatpush1.msra.mxu0 %v170
    %343 = vmatprep.subr.mxu0 %v177
    %344 = vmatpush1.msra.mxu0 %v176
    %345 = vmatprep.subr.mxu0 %v183
    %346 = vmatpush1.msra.mxu0 %v182
    %347 = vmatprep.subr.mxu0 %v189
    %348 = vmatpush1.msra.mxu0 %v188
    %349 = vmatprep.subr.mxu0 %v195
    %350 = vmatpush1.msra.mxu0 %v194
    %351 = vmatprep.subr.mxu0 %v201
    %352 = vmatpush1.msra.mxu0 %v200
    %353 = vmatprep.subr.mxu0 %v207
    %354 = vmatpush1.msra.mxu0 %v206
    %355 = vmatprep.subr.mxu0 %v213
    %356 = vmatpush1.msra.mxu0 %v212
    %357 = vmatprep.subr.mxu0 %v219
    %358 = vmatpush1.msra.mxu0 %v218
    %359 = vmatprep.subr.mxu0 %v225
    %360 = vmatpush1.msra.mxu0 %v224
    %361 = vmatprep.subr.mxu0 %v231
    %362 = vmatpush1.msra.mxu0 %v230
    %363 = vmatprep.subr.mxu0 %v237
    %364 = vmatpush1.msra.mxu0 %v236
    %365 = vmatprep.subr.mxu0 %v243
    %366 = vmatpush1.msra.mxu0 %v242
    %367 = vmatprep.subr.mxu0 %v249
    %368 = vmatpush1.msra.mxu0 %v248
    %369 = vmatprep.subr.mxu0 %v255
    %370 = vmatpush1.msra.mxu0 %v254
    %371 = vmatprep.subr.mxu0 %v261
    %372 = vmatpush1.msra.mxu0 %v260
    %373 = vmatprep.subr.mxu0 0.0
    %374 = vmatpush1.msra.mxu0 0.0
    %375 = vmatprep.subr.mxu0 0.0
    %376 = vmatpush1.msra.mxu0 0.0
    %377 = vmatprep.subr.mxu0 0.0
    %378 = vmatpush1.msra.mxu0 0.0
    %379 = vmatprep.subr.mxu0 0.0
    %380 = vmatpush1.msra.mxu0 0.0
    %381 = vmatprep.subr.mxu0 0.0
    %382 = vmatpush1.msra.mxu0 0.0
    %383 = vmatprep.subr.mxu0 0.0
    %384 = vmatpush1.msra.mxu0 0.0
    %385 = vmatprep.subr.mxu0 0.0
    %386 = vmatpush1.msra.mxu0 0.0
    %387 = vmatprep.subr.mxu0 0.0
    %388 = vmatpush1.msra.mxu0 0.0
    %389 = vmatprep.subr.mxu0 0.0
    %390 = vmatpush1.msra.mxu0 0.0
    %391 = vmatprep.subr.mxu0 0.0
    %392 = vmatpush1.msra.mxu0 0.0
    %393 = vmatprep.subr.mxu0 0.0
    %394 = vmatpush1.msra.mxu0 0.0
    %395 = vmatprep.subr.mxu0 0.0
    %396 = vmatpush1.msra.mxu0 0.0
    %397 = vmatprep.subr.mxu0 0.0
    %398 = vmatpush1.msra.mxu0 0.0
    %399 = vmatprep.subr.mxu0 0.0
    %400 = vmatpush1.msra.mxu0 0.0
    %401 = vmatprep.subr.mxu0 0.0
    %402 = vmatpush1.msra.mxu0 0.0
    %403 = vmatprep.subr.mxu0 0.0
    %404 = vmatpush1.msra.mxu0 0.0
    %405 = vmatprep.mubr.f32.mxu0 0.0
    %406 = vmatmul.mubr.f32.gmra.mrb[0].mxu0 %v70
    %v407 = vpop.f32.mrb[0].mxu0
    %v408 = vadd.f32 0.0, %v407
    %v409 = vpop.f32.mrb[0].mxu0
    %v410 = vadd.f32 0.0, %v409
    %411 = vmatprep.mubr.f32.mxu0 0.0
    %412 = vmatmul.mubr.f32.gmra.mrb[0].mxu0 %v71
    %v413 = vpop.f32.mrb[0].mxu0
    %v414 = vadd.f32 0.0, %v413
    %v415 = vpop.f32.mrb[0].mxu0
    %v416 = vadd.f32 0.0, %v415
    %417 = vdwg.mxu0
    %418 = vmatprep.subr.mxu0 %v173
    %419 = vmatpush1.msra.mxu0 %v172
    %420 = vmatprep.subr.mxu0 %v179
    %421 = vmatpush1.msra.mxu0 %v178
    %422 = vmatprep.subr.mxu0 %v185
    %423 = vmatpush1.msra.mxu0 %v184
    %424 = vmatprep.subr.mxu0 %v191
    %425 = vmatpush1.msra.mxu0 %v190
    %426 = vmatprep.subr.mxu0 %v197
    %427 = vmatpush1.msra.mxu0 %v196
    %428 = vmatprep.subr.mxu0 %v203
    %429 = vmatpush1.msra.mxu0 %v202
    %430 = vmatprep.subr.mxu0 %v209
    %431 = vmatpush1.msra.mxu0 %v208
    %432 = vmatprep.subr.mxu0 %v215
    %433 = vmatpush1.msra.mxu0 %v214
    %434 = vmatprep.subr.mxu0 %v221
    %435 = vmatpush1.msra.mxu0 %v220
    %436 = vmatprep.subr.mxu0 %v227
    %437 = vmatpush1.msra.mxu0 %v226
    %438 = vmatprep.subr.mxu0 %v233
    %439 = vmatpush1.msra.mxu0 %v232
    %440 = vmatprep.subr.mxu0 %v239
    %441 = vmatpush1.msra.mxu0 %v238
    %442 = vmatprep.subr.mxu0 %v245
    %443 = vmatpush1.msra.mxu0 %v244
    %444 = vmatprep.subr.mxu0 %v251
    %445 = vmatpush1.msra.mxu0 %v250
    %446 = vmatprep.subr.mxu0 %v257
    %447 = vmatpush1.msra.mxu0 %v256
    %448 = vmatprep.subr.mxu0 %v263
    %449 = vmatpush1.msra.mxu0 %v262
    %450 = vmatprep.subr.mxu0 0.0
    %451 = vmatpush1.msra.mxu0 0.0
    %452 = vmatprep.subr.mxu0 0.0
    %453 = vmatpush1.msra.mxu0 0.0
    %454 = vmatprep.subr.mxu0 0.0
    %455 = vmatpush1.msra.mxu0 0.0
    %456 = vmatprep.subr.mxu0 0.0
    %457 = vmatpush1.msra.mxu0 0.0
    %458 = vmatprep.subr.mxu0 0.0
    %459 = vmatpush1.msra.mxu0 0.0
    %460 = vmatprep.subr.mxu0 0.0
    %461 = vmatpush1.msra.mxu0 0.0
    %462 = vmatprep.subr.mxu0 0.0
    %463 = vmatpush1.msra.mxu0 0.0
    %464 = vmatprep.subr.mxu0 0.0
    %465 = vmatpush1.msra.mxu0 0.0
    %466 = vmatprep.subr.mxu0 0.0
    %467 = vmatpush1.msra.mxu0 0.0
    %468 = vmatprep.subr.mxu0 0.0
    %469 = vmatpush1.msra.mxu0 0.0
    %470 = vmatprep.subr.mxu0 0.0
    %471 = vmatpush1.msra.mxu0 0.0
    %472 = vmatprep.subr.mxu0 0.0
    %473 = vmatpush1.msra.mxu0 0.0
    %474 = vmatprep.subr.mxu0 0.0
    %475 = vmatpush1.msra.mxu0 0.0
    %476 = vmatprep.subr.mxu0 0.0
    %477 = vmatpush1.msra.mxu0 0.0
    %478 = vmatprep.subr.mxu0 0.0
    %479 = vmatpush1.msra.mxu0 0.0
    %480 = vmatprep.subr.mxu0 0.0
    %481 = vmatpush1.msra.mxu0 0.0
    %482 = vmatprep.mubr.f32.mxu0 0.0
    %483 = vmatmul.mubr.f32.gmra.mrb[0].mxu0 %v70
    %v484 = vpop.f32.mrb[0].mxu0
    %v485 = vadd.f32 0.0, %v484
    %v486 = vpop.f32.mrb[0].mxu0
    %v487 = vadd.f32 0.0, %v486
    %488 = vmatprep.mubr.f32.mxu0 0.0
    %489 = vmatmul.mubr.f32.gmra.mrb[0].mxu0 %v71
    %v490 = vpop.f32.mrb[0].mxu0
    %v491 = vadd.f32 0.0, %v490
    %v492 = vpop.f32.mrb[0].mxu0
    %v493 = vadd.f32 0.0, %v492
    %494 = vdwg.mxu0
    %495 = vmatprep.subr.mxu0 %v73
    %496 = vmatpush1.msra.mxu0 %v72
    %497 = vmatprep.subr.mxu0 %v79
    %498 = vmatpush1.msra.mxu0 %v78
    %499 = vmatprep.subr.mxu0 %v85
    %500 = vmatpush1.msra.mxu0 %v84
    %501 = vmatprep.subr.mxu0 %v91
    %502 = vmatpush1.msra.mxu0 %v90
    %503 = vmatprep.subr.mxu0 %v97
    %504 = vmatpush1.msra.mxu0 %v96
    %505 = vmatprep.subr.mxu0 %v103
    %506 = vmatpush1.msra.mxu0 %v102
    %507 = vmatprep.subr.mxu0 %v109
    %508 = vmatpush1.msra.mxu0 %v108
    %509 = vmatprep.subr.mxu0 %v115
    %510 = vmatpush1.msra.mxu0 %v114
    %511 = vmatprep.subr.mxu0 %v121
    %512 = vmatpush1.msra.mxu0 %v120
    %513 = vmatprep.subr.mxu0 %v127
    %514 = vmatpush1.msra.mxu0 %v126
    %515 = vmatprep.subr.mxu0 %v133
    %516 = vmatpush1.msra.mxu0 %v132
    %517 = vmatprep.subr.mxu0 %v139
    %518 = vmatpush1.msra.mxu0 %v138
    %519 = vmatprep.subr.mxu0 %v145
    %520 = vmatpush1.msra.mxu0 %v144
    %521 = vmatprep.subr.mxu0 %v151
    %522 = vmatpush1.msra.mxu0 %v150
    %523 = vmatprep.subr.mxu0 %v157
    %524 = vmatpush1.msra.mxu0 %v156
    %525 = vmatprep.subr.mxu0 %v163
    %526 = vmatpush1.msra.mxu0 %v162
    %527 = vmatprep.subr.mxu0 0.0
    %528 = vmatpush1.msra.mxu0 0.0
    %529 = vmatprep.subr.mxu0 0.0
    %530 = vmatpush1.msra.mxu0 0.0
    %531 = vmatprep.subr.mxu0 0.0
    %532 = vmatpush1.msra.mxu0 0.0
    %533 = vmatprep.subr.mxu0 0.0
    %534 = vmatpush1.msra.mxu0 0.0
    %535 = vmatprep.subr.mxu0 0.0
    %536 = vmatpush1.msra.mxu0 0.0
    %537 = vmatprep.subr.mxu0 0.0
    %538 = vmatpush1.msra.mxu0 0.0
    %539 = vmatprep.subr.mxu0 0.0
    %540 = vmatpush1.msra.mxu0 0.0
    %541 = vmatprep.subr.mxu0 0.0
    %542 = vmatpush1.msra.mxu0 0.0
    %543 = vmatprep.subr.mxu0 0.0
    %544 = vmatpush1.msra.mxu0 0.0
    %545 = vmatprep.subr.mxu0 0.0
    %546 = vmatpush1.msra.mxu0 0.0
    %547 = vmatprep.subr.mxu0 0.0
    %548 = vmatpush1.msra.mxu0 0.0
    %549 = vmatprep.subr.mxu0 0.0
    %550 = vmatpush1.msra.mxu0 0.0
    %551 = vmatprep.subr.mxu0 0.0
    %552 = vmatpush1.msra.mxu0 0.0
    %553 = vmatprep.subr.mxu0 0.0
    %554 = vmatpush1.msra.mxu0 0.0
    %555 = vmatprep.subr.mxu0 0.0
    %556 = vmatpush1.msra.mxu0 0.0
    %557 = vmatprep.subr.mxu0 0.0
    %558 = vmatpush1.msra.mxu0 0.0
    %559 = vmatprep.mubr.f32.mxu0 0.0
    %560 = vmatmul.mubr.f32.gmra.mrb[0].mxu0 %v68
    %v561 = vpop.f32.mrb[0].mxu0
    %v562 = vadd.f32 %v331, %v561
    %v563 = vpop.f32.mrb[0].mxu0
    %v564 = vadd.f32 %v333, %v563
    %565 = vmatprep.mubr.f32.mxu0 0.0
    %566 = vmatmul.mubr.f32.gmra.mrb[0].mxu0 %v69
    %v567 = vpop.f32.mrb[0].mxu0
    %v568 = vadd.f32 %v337, %v567
    %v569 = vpop.f32.mrb[0].mxu0
    %v570 = vadd.f32 %v339, %v569
    %571 = vdwg.mxu0
    %572 = vmatprep.subr.mxu0 %v75
    %573 = vmatpush1.msra.mxu0 %v74
    %574 = vmatprep.subr.mxu0 %v81
    %575 = vmatpush1.msra.mxu0 %v80
    %576 = vmatprep.subr.mxu0 %v87
    %577 = vmatpush1.msra.mxu0 %v86
    %578 = vmatprep.subr.mxu0 %v93
    %579 = vmatpush1.msra.mxu0 %v92
    %580 = vmatprep.subr.mxu0 %v99
    %581 = vmatpush1.msra.mxu0 %v98
    %582 = vmatprep.subr.mxu0 %v105
    %583 = vmatpush1.msra.mxu0 %v104
    %584 = vmatprep.subr.mxu0 %v111
    %585 = vmatpush1.msra.mxu0 %v110
    %586 = vmatprep.subr.mxu0 %v117
    %587 = vmatpush1.msra.mxu0 %v116
    %588 = vmatprep.subr.mxu0 %v123
    %589 = vmatpush1.msra.mxu0 %v122
    %590 = vmatprep.subr.mxu0 %v129
    %591 = vmatpush1.msra.mxu0 %v128
    %592 = vmatprep.subr.mxu0 %v135
    %593 = vmatpush1.msra.mxu0 %v134
    %594 = vmatprep.subr.mxu0 %v141
    %595 = vmatpush1.msra.mxu0 %v140
    %596 = vmatprep.subr.mxu0 %v147
    %597 = vmatpush1.msra.mxu0 %v146
    %598 = vmatprep.subr.mxu0 %v153
    %599 = vmatpush1.msra.mxu0 %v152
    %600 = vmatprep.subr.mxu0 %v159
    %601 = vmatpush1.msra.mxu0 %v158
    %602 = vmatprep.subr.mxu0 %v165
    %603 = vmatpush1.msra.mxu0 %v164
    %604 = vmatprep.subr.mxu0 0.0
    %605 = vmatpush1.msra.mxu0 0.0
    %606 = vmatprep.subr.mxu0 0.0
    %607 = vmatpush1.msra.mxu0 0.0
    %608 = vmatprep.subr.mxu0 0.0
    %609 = vmatpush1.msra.mxu0 0.0
    %610 = vmatprep.subr.mxu0 0.0
    %611 = vmatpush1.msra.mxu0 0.0
    %612 = vmatprep.subr.mxu0 0.0
    %613 = vmatpush1.msra.mxu0 0.0
    %614 = vmatprep.subr.mxu0 0.0
    %615 = vmatpush1.msra.mxu0 0.0
    %616 = vmatprep.subr.mxu0 0.0
    %617 = vmatpush1.msra.mxu0 0.0
    %618 = vmatprep.subr.mxu0 0.0
    %619 = vmatpush1.msra.mxu0 0.0
    %620 = vmatprep.subr.mxu0 0.0
    %621 = vmatpush1.msra.mxu0 0.0
    %622 = vmatprep.subr.mxu0 0.0
    %623 = vmatpush1.msra.mxu0 0.0
    %624 = vmatprep.subr.mxu0 0.0
    %625 = vmatpush1.msra.mxu0 0.0
    %626 = vmatprep.subr.mxu0 0.0
    %627 = vmatpush1.msra.mxu0 0.0
    %628 = vmatprep.subr.mxu0 0.0
    %629 = vmatpush1.msra.mxu0 0.0
    %630 = vmatprep.subr.mxu0 0.0
    %631 = vmatpush1.msra.mxu0 0.0
    %632 = vmatprep.subr.mxu0 0.0
    %633 = vmatpush1.msra.mxu0 0.0
    %634 = vmatprep.subr.mxu0 0.0
    %635 = vmatpush1.msra.mxu0 0.0
    %636 = vmatprep.mubr.f32.mxu0 0.0
    %637 = vmatmul.mubr.f32.gmra.mrb[0].mxu0 %v68
    %v638 = vpop.f32.mrb[0].mxu0
    %v639 = vadd.f32 %v408, %v638
    %v640 = vpop.f32.mrb[0].mxu0
    %v641 = vadd.f32 %v410, %v640
    %642 = vmatprep.mubr.f32.mxu0 0.0
    %643 = vmatmul.mubr.f32.gmra.mrb[0].mxu0 %v69
    %v644 = vpop.f32.mrb[0].mxu0
    %v645 = vadd.f32 %v414, %v644
    %v646 = vpop.f32.mrb[0].mxu0
    %v647 = vadd.f32 %v416, %v646
    %648 = vdwg.mxu0
    %649 = vmatprep.subr.mxu0 %v77
    %650 = vmatpush1.msra.mxu0 %v76
    %651 = vmatprep.subr.mxu0 %v83
    %652 = vmatpush1.msra.mxu0 %v82
    %653 = vmatprep.subr.mxu0 %v89
    %654 = vmatpush1.msra.mxu0 %v88
    %655 = vmatprep.subr.mxu0 %v95
    %656 = vmatpush1.msra.mxu0 %v94
    %657 = vmatprep.subr.mxu0 %v101
    %658 = vmatpush1.msra.mxu0 %v100
    %659 = vmatprep.subr.mxu0 %v107
    %660 = vmatpush1.msra.mxu0 %v106
    %661 = vmatprep.subr.mxu0 %v113
    %662 = vmatpush1.msra.mxu0 %v112
    %663 = vmatprep.subr.mxu0 %v119
    %664 = vmatpush1.msra.mxu0 %v118
    %665 = vmatprep.subr.mxu0 %v125
    %666 = vmatpush1.msra.mxu0 %v124
    %667 = vmatprep.subr.mxu0 %v131
    %668 = vmatpush1.msra.mxu0 %v130
    %669 = vmatprep.subr.mxu0 %v137
    %670 = vmatpush1.msra.mxu0 %v136
    %671 = vmatprep.subr.mxu0 %v143
    %672 = vmatpush1.msra.mxu0 %v142
    %673 = vmatprep.subr.mxu0 %v149
    %674 = vmatpush1.msra.mxu0 %v148
    %675 = vmatprep.subr.mxu0 %v155
    %676 = vmatpush1.msra.mxu0 %v154
    %677 = vmatprep.subr.mxu0 %v161
    %678 = vmatpush1.msra.mxu0 %v160
    %679 = vmatprep.subr.mxu0 %v167
    %680 = vmatpush1.msra.mxu0 %v166
    %681 = vmatprep.subr.mxu0 0.0
    %682 = vmatpush1.msra.mxu0 0.0
    %683 = vmatprep.subr.mxu0 0.0
    %684 = vmatpush1.msra.mxu0 0.0
    %685 = vmatprep.subr.mxu0 0.0
    %686 = vmatpush1.msra.mxu0 0.0
    %687 = vmatprep.subr.mxu0 0.0
    %688 = vmatpush1.msra.mxu0 0.0
    %689 = vmatprep.subr.mxu0 0.0
    %690 = vmatpush1.msra.mxu0 0.0
    %691 = vmatprep.subr.mxu0 0.0
    %692 = vmatpush1.msra.mxu0 0.0
    %693 = vmatprep.subr.mxu0 0.0
    %694 = vmatpush1.msra.mxu0 0.0
    %695 = vmatprep.subr.mxu0 0.0
    %696 = vmatpush1.msra.mxu0 0.0
    %697 = vmatprep.subr.mxu0 0.0
    %698 = vmatpush1.msra.mxu0 0.0
    %699 = vmatprep.subr.mxu0 0.0
    %700 = vmatpush1.msra.mxu0 0.0
    %701 = vmatprep.subr.mxu0 0.0
    %702 = vmatpush1.msra.mxu0 0.0
    %703 = vmatprep.subr.mxu0 0.0
    %704 = vmatpush1.msra.mxu0 0.0
    %705 = vmatprep.subr.mxu0 0.0
    %706 = vmatpush1.msra.mxu0 0.0
    %707 = vmatprep.subr.mxu0 0.0
    %708 = vmatpush1.msra.mxu0 0.0
    %709 = vmatprep.subr.mxu0 0.0
    %710 = vmatpush1.msra.mxu0 0.0
    %711 = vmatprep.subr.mxu0 0.0
    %712 = vmatpush1.msra.mxu0 0.0
    %713 = vmatprep.mubr.f32.mxu0 0.0
    %714 = vmatmul.mubr.f32.gmra.mrb[0].mxu0 %v68
    %v715 = vpop.f32.mrb[0].mxu0
    %v716 = vadd.f32 %v485, %v715
    %v717 = vpop.f32.mrb[0].mxu0
    %v718 = vadd.f32 %v487, %v717
    %719 = vmatprep.mubr.f32.mxu0 0.0
    %720 = vmatmul.mubr.f32.gmra.mrb[0].mxu0 %v69
    %v721 = vpop.f32.mrb[0].mxu0
    %v722 = vadd.f32 %v491, %v721
    %v723 = vpop.f32.mrb[0].mxu0
    %v724 = vadd.f32 %v493, %v723
    %725 = vdwg.mxu0
    %v726 = vld [vmem:[%s5] sm:$0x3f]
    %v728 = vlaneseq
    %v729 = vshrl.u32 %v728, 7
    %v730 = vsub.s32 0, %v729
    %v731 = vrot.slane %v726, %v730
    %v732 = vlaneseq
    %v733 = vshrl.u32 %v732, 7
    %v734 = vsub.s32 1, %v733
    %v735 = vrot.slane %v726, %v734
    %v736 = vlaneseq
    %v737 = vshrl.u32 %v736, 7
    %v738 = vsub.s32 2, %v737
    %v739 = vrot.slane %v726, %v738
    %v740 = vlaneseq
    %v741 = vshrl.u32 %v740, 7
    %v742 = vsub.s32 3, %v741
    %v743 = vrot.slane %v726, %v742
    %v744 = vlaneseq
    %v745 = vshrl.u32 %v744, 7
    %v746 = vsub.s32 4, %v745
    %v747 = vrot.slane %v726, %v746
    %v748 = vlaneseq
    %v749 = vshrl.u32 %v748, 7
    %v750 = vsub.s32 5, %v749
    %v751 = vrot.slane %v726, %v750
    %v758 = vadd.f32 %v562, %v731
    %v759 = vadd.f32 %v564, %v735
    %v760 = vadd.f32 %v639, %v739
    %v761 = vadd.f32 %v641, %v743
    %v762 = vadd.f32 %v716, %v747
    %v763 = vadd.f32 %v718, %v751
    %v764 = vadd.f32 %v568, %v731
    %v765 = vadd.f32 %v570, %v735
    %v766 = vadd.f32 %v645, %v739
    %v767 = vadd.f32 %v647, %v743
    %v768 = vadd.f32 %v722, %v747
    %v769 = vadd.f32 %v724, %v751
    %v770 = vtanh.pop %v758
    %v771 = vtanh.pop %v764
    %v772 = vmul.f32 %v770, 0.5
    %v773 = vmul.f32 %v771, 0.5
    %v774 = vadd.f32 %v772, 0.5
    %v775 = vadd.f32 %v773, 0.5
    %v776 = vtanh.pop %v759
    %v777 = vtanh.pop %v765
    %v778 = vmul.f32 %v776, 0.5
    %v779 = vmul.f32 %v777, 0.5
    %v780 = vadd.f32 %v778, 0.5
    %v781 = vadd.f32 %v779, 0.5
    %v782 = vtanh.pop %v760
    %v783 = vtanh.pop %v766
    %v784 = vmul.f32 %v782, 0.5
    %v785 = vmul.f32 %v783, 0.5
    %v786 = vadd.f32 %v784, 0.5
    %v787 = vadd.f32 %v785, 0.5
    %v788 = vtanh.pop %v761
    %v789 = vtanh.pop %v767
    %v790 = vmul.f32 %v788, 0.5
    %v791 = vmul.f32 %v789, 0.5
    %v792 = vadd.f32 %v790, 0.5
    %v793 = vadd.f32 %v791, 0.5
    %v794 = vtanh.pop %v762
    %v795 = vtanh.pop %v768
    %v796 = vld [vmem:[#allocation5] sm:$0xff]
    %v797 = vld [vmem:[#allocation5 + $0x8] sm:$0xff]
    %v798 = vld [vmem:[%s3] sm:$0xff]
    %v799 = vld [vmem:[%s3 + $0x8] sm:$0xff]
    %801 = vset.pattern.permute.xlu0 0
    %802 = vperm.xlu0 %801, %v798
    %v803 = vpop.permute.xlu0 %802
    %806 = vset.pattern.permute.xlu0 0
    %807 = vperm.xlu0 %806, %v799
    %v808 = vpop.permute.xlu0 %807
    %v810 = vmul.f32 %v780, %v796
    %v811 = vmul.f32 %v781, %v797
    %v812 = vmul.f32 %v774, %v794
    %v813 = vmul.f32 %v775, %v795
    %v814 = vadd.f32 %v810, %v812
    %v815 = vadd.f32 %v811, %v813
    %v816 = vsub.f32 %v814, %v796
    %v817 = vsub.f32 %v815, %v797
    %v818 = vmul.f32 %v803, %v816
    %v819 = vmul.f32 %v808, %v817
    %v820 = vadd.f32 %v796, %v818
    %v821 = vadd.f32 %v797, %v819
    %v822 = vmul.f32 %v792, %v786
    %v823 = vmul.f32 %v793, %v787
    %v824 = vtanh.pop %v820
    %v825 = vtanh.pop %v821
    %v826 = vmul.f32 %v822, %v824
    %v827 = vmul.f32 %v823, %v825
    %v828 = vsub.f32 1.0, %v792
    %v829 = vsub.f32 1.0, %v793
    %v830 = vmul.f32 %v828, %v763
    %v831 = vmul.f32 %v829, %v769
    %v832 = vadd.f32 %v826, %v830
    %v833 = vadd.f32 %v827, %v831
    %v834 = vsub.f32 %v832, %v70
    %v835 = vsub.f32 %v833, %v71
    %v836 = vmul.f32 %v803, %v834
    %v837 = vmul.f32 %v808, %v835
    %v838 = vadd.f32 %v70, %v836
    %v839 = vadd.f32 %v71, %v837
    %840 = vst [vmem:[#allocation8] sm:$0xff] %v838
    %841 = vst [vmem:[#allocation8 + $0x8] sm:$0xff] %v839
    %842 = vst [vmem:[#allocation9] sm:$0xff] %v820
    %843 = vst [vmem:[#allocation9 + $0x8] sm:$0xff] %v821
    // Predicated region
    $region38: #{tpu_custom_call.1} parent=1 // pred_check
      _
    $region39: #{tpu_custom_call.1} parent=1 // pred_check_branch
      %845 = sbr.rel (0) target = $region41
    $region40: #{tpu_custom_call.1} parent=1 // pred_region
      %s847 = ssub.s32 256, 256
      %848 = vsyncadd [#allocation4], %s847
      %s849 = sshll.u32 [#allocation8], 4
      %s850 = int_to_ptr.vmem [resolvable:$true] %s849
      %855 = dma.vmem_to_hbm [thread:$0]  %s850, 256, %s6, [#allocation4], 128, 128, 8
    $region41: #{tpu_custom_call.1} parent=1 // pred_fallthru
      _
    // Predicated region
    $region42: #{tpu_custom_call.1} parent=1 // pred_check
      _
    $region43: #{tpu_custom_call.1} parent=1 // pred_check_branch
      %857 = sbr.rel (0) target = $region45
    $region44: #{tpu_custom_call.1} parent=1 // pred_region
      %s859 = ssub.s32 256, 256
      %860 = vsyncadd [#allocation10], %s859
      %s861 = sshll.u32 [#allocation9], 4
      %s862 = int_to_ptr.vmem [resolvable:$true] %s861
      %867 = dma.vmem_to_hbm [thread:$0]  %s862, 256, %s7, [#allocation10], 128, 128, 8
    $region45: #{tpu_custom_call.1} parent=1 // pred_fallthru
      _
    // Predicated region
    $region46: #{tpu_custom_call.1} parent=1 // pred_check
      _
    $region47: #{tpu_custom_call.1} parent=1 // pred_check_branch
      %869 = sbr.rel (0) target = $region49
    $region48: #{tpu_custom_call.1} parent=1 // pred_region
      %870 = dma.done [#allocation4], 256
    $region49: #{tpu_custom_call.1} parent=1 // pred_fallthru
      _
    // Predicated region
    $region50: #{tpu_custom_call.1} parent=1 // pred_check
      _
    $region51: #{tpu_custom_call.1} parent=1 // pred_check_branch
      %872 = sbr.rel (0) target = $region53
    $region52: #{tpu_custom_call.1} parent=1 // pred_region
      %873 = dma.done [#allocation10], 256
    $region53: #{tpu_custom_call.1} parent=1 // pred_fallthru
      _
    %874 = vsyncpa [#allocation3], 1
    %875 = vsyncpa [#allocation6], 1
    %876 = vsyncpa [#allocation4], 1
    %877 = vsyncpa [#allocation10], 1

// kernel: tpu_custom_call.1
$region0: #{tpu_custom_call.1}
  #allocation0 [shape = 'u32[]', space=smem, size = 0x4, offset = 0x4, fixed_abs, tag = 'smem constant byte address 0x4 - core index']
  #allocation1 [shape = 'u32[144,128]{1,0:T(1,128)}', space=vmem, size = 0x12000, scoped, tag = 'internal scratch']
  %s0 = inlined_call_operand.vmem [shape: f32[16,128], index: 0, kind: input, shape index: {}]
  %s1 = inlined_call_operand.hbm [shape: f32[16,128], index: 1, kind: input, shape index: {}]
  %s2 = inlined_call_operand.hbm [shape: f32[16,128], index: 2, kind: input, shape index: {}]
  %s3 = inlined_call_operand.vmem [shape: f32[16,1], index: 3, kind: input, shape index: {}]
  %s4 = inlined_call_operand.hbm [shape: f32[256,768], index: 4, kind: input, shape index: {}]
  %s5 = inlined_call_operand.vmem [shape: f32[1,768], index: 5, kind: input, shape index: {}]
  %s6 = inlined_call_operand.hbm [shape: f32[16,128], index: 6, kind: output, shape index: {0}]
  %s7 = inlined_call_operand.hbm [shape: f32[16,128], index: 7, kind: output, shape index: {1}]
  %8 = xla_tuple %s6, %s7
  %s9 = sld [smem:[#allocation0]]
  $region54: #{tpu_custom_call.1} parent=0
    _
  %s11 = ssub.s32 1, %s9
  %s12 = scalar_select 0, %s11, %s9
  $region1: #{tpu_custom_call.1} parent=0
    #allocation2 [shape = 'u8[8192]{0}', space=vmem, size = 0x2000, scoped, tag = 'input window, operand 1, single buffered']
    #allocation3 [shape = 's32[1]{0}', space=sflag, size = 0x4, scoped, tag = 'scoped memory for tpu_custom_call.1']
    #allocation4 [shape = 's32[1]{0}', space=sflag, size = 0x4, scoped, tag = 'scoped memory for tpu_custom_call.1']
    #allocation5 [shape = 'u8[8192]{0}', space=vmem, size = 0x2000, scoped, tag = 'input window, operand 2, single buffered']
    #allocation6 [shape = 's32[1]{0}', space=sflag, size = 0x4, scoped, tag = 'scoped memory for tpu_custom_call.1']
    #allocation7 [shape = 'u8[786432]{0}', space=vmem, size = 0xc0000, scoped, tag = 'input window, operand 4, single buffered']
    #allocation8 [shape = 'u8[8192]{0}', space=vmem, size = 0x2000, scoped, tag = 'output window, operand 0, single buffered']
    #allocation9 [shape = 'u8[8192]{0}', space=vmem, size = 0x2000, scoped, tag = 'output window, operand 1, single buffered']
    #allocation10 [shape = 's32[1]{0}', space=sflag, size = 0x4, scoped, tag = 'scoped memory for tpu_custom_call.1']
    %13 = vsyncpa [#allocation3], 0
    %14 = vsyncpa [#allocation6], 0
    %15 = vsyncpa [#allocation4], 0
    %16 = vsyncpa [#allocation10], 0
    // Predicated region
    $region2: #{tpu_custom_call.1} parent=1 // pred_check
      _
    $region3: #{tpu_custom_call.1} parent=1 // pred_check_branch
      %18 = sbr.rel (0) target = $region5
    $region4: #{tpu_custom_call.1} parent=1 // pred_region
      _
    $region5: #{tpu_custom_call.1} parent=1 // pred_fallthru
      _
    // Predicated region
    $region6: #{tpu_custom_call.1} parent=1 // pred_check
      _
    $region7: #{tpu_custom_call.1} parent=1 // pred_check_branch
      %20 = sbr.rel (0) target = $region9
    $region8: #{tpu_custom_call.1} parent=1 // pred_region
      %s22 = ssub.s32 256, 256
      %23 = vsyncadd [#allocation3], %s22
      %s24 = sshll.u32 [#allocation2], 4
      %s25 = int_to_ptr.vmem [resolvable:$true] %s24
      %30 = dma.hbm_to_vmem [thread:$0]  %s1, 256, %s25, [#allocation3], 128, 128, 8
    $region9: #{tpu_custom_call.1} parent=1 // pred_fallthru
      _
    // Predicated region
    $region10: #{tpu_custom_call.1} parent=1 // pred_check
      _
    $region11: #{tpu_custom_call.1} parent=1 // pred_check_branch
      %32 = sbr.rel (0) target = $region13
    $region12: #{tpu_custom_call.1} parent=1 // pred_region
      %s34 = ssub.s32 256, 256
      %35 = vsyncadd [#allocation6], %s34
      %s36 = sshll.u32 [#allocation5], 4
      %s37 = int_to_ptr.vmem [resolvable:$true] %s36
      %42 = dma.hbm_to_vmem [thread:$0]  %s2, 256, %s37, [#allocation6], 128, 128, 8
    $region13: #{tpu_custom_call.1} parent=1 // pred_fallthru
      _
    // Predicated region
    $region14: #{tpu_custom_call.1} parent=1 // pred_check
      _
    $region15: #{tpu_custom_call.1} parent=1 // pred_check_branch
      %44 = sbr.rel (0) target = $region17
    $region16: #{tpu_custom_call.1} parent=1 // pred_region
      _
    $region17: #{tpu_custom_call.1} parent=1 // pred_fallthru
      _
    // Predicated region
    $region18: #{tpu_custom_call.1} parent=1 // pred_check
      _
    $region19: #{tpu_custom_call.1} parent=1 // pred_check_branch
      %46 = sbr.rel (0) target = $region21
    $region20: #{tpu_custom_call.1} parent=1 // pred_region
      %s48 = ssub.s32 24576, 24576
      %49 = vsyncadd [#allocation6], %s48
      %s50 = sshll.u32 [#allocation7], 4
      %s51 = int_to_ptr.vmem [resolvable:$true] %s50
      %56 = dma.hbm_to_vmem [thread:$0]  %s4, 24576, %s51, [#allocation6], 768, 768, 48
    $region21: #{tpu_custom_call.1} parent=1 // pred_fallthru
      _
    // Predicated region
    $region22: #{tpu_custom_call.1} parent=1 // pred_check
      _
    $region23: #{tpu_custom_call.1} parent=1 // pred_check_branch
      %58 = sbr.rel (0) target = $region25
    $region24: #{tpu_custom_call.1} parent=1 // pred_region
      _
    $region25: #{tpu_custom_call.1} parent=1 // pred_fallthru
      _
    // Predicated region
    $region26: #{tpu_custom_call.1} parent=1 // pred_check
      _
    $region27: #{tpu_custom_call.1} parent=1 // pred_check_branch
      %60 = sbr.rel (0) target = $region29
    $region28: #{tpu_custom_call.1} parent=1 // pred_region
      %61 = dma.done [#allocation3], 256
    $region29: #{tpu_custom_call.1} parent=1 // pred_fallthru
      _
    // Predicated region
    $region30: #{tpu_custom_call.1} parent=1 // pred_check
      _
    $region31: #{tpu_custom_call.1} parent=1 // pred_check_branch
      %63 = sbr.rel (0) target = $region33
    $region32: #{tpu_custom_call.1} parent=1 // pred_region
      %64 = dma.done [#allocation6], 256
    $region33: #{tpu_custom_call.1} parent=1 // pred_fallthru
      _
    // Predicated region
    $region34: #{tpu_custom_call.1} parent=1 // pred_check
      _
    $region35: #{tpu_custom_call.1} parent=1 // pred_check_branch
      %66 = sbr.rel (0) target = $region37
    $region36: #{tpu_custom_call.1} parent=1 // pred_region
      %67 = dma.done [#allocation6], 24576
    $region37: #{tpu_custom_call.1} parent=1 // pred_fallthru
      _
    %v68 = vld [vmem:[%s0] sm:$0xff]
    %v69 = vld [vmem:[%s0 + $0x8] sm:$0xff]
    %v70 = vld [vmem:[#allocation2] sm:$0xff]
    %v71 = vld [vmem:[#allocation2 + $0x8] sm:$0xff]
    %v72 = vld [vmem:[#allocation7] sm:$0xff]
    %v73 = vld [vmem:[#allocation7 + $0x8] sm:$0xff]
    %v74 = vld [vmem:[#allocation7 + $0x10] sm:$0xff]
    %v75 = vld [vmem:[#allocation7 + $0x18] sm:$0xff]
    %v76 = vld [vmem:[#allocation7 + $0x20] sm:$0xff]
    %v77 = vld [vmem:[#allocation7 + $0x28] sm:$0xff]
    %v78 = vld [vmem:[#allocation7 + $0x30] sm:$0xff]
    %v79 = vld [vmem:[#allocation7 + $0x38] sm:$0xff]
    %v80 = vld [vmem:[#allocation7 + $0x40] sm:$0xff]
    %v81 = vld [vmem:[#allocation7 + $0x48] sm:$0xff]
    %v82 = vld [vmem:[#allocation7 + $0x50] sm:$0xff]
    %v83 = vld [vmem:[#allocation7 + $0x58] sm:$0xff]
    %v84 = vld [vmem:[#allocation7 + $0x60] sm:$0xff]
    %v85 = vld [vmem:[#allocation7 + $0x68] sm:$0xff]
    %v86 = vld [vmem:[#allocation7 + $0x70] sm:$0xff]
    %v87 = vld [vmem:[#allocation7 + $0x78] sm:$0xff]
    %v88 = vld [vmem:[#allocation7 + $0x80] sm:$0xff]
    %v89 = vld [vmem:[#allocation7 + $0x88] sm:$0xff]
    %v90 = vld [vmem:[#allocation7 + $0x90] sm:$0xff]
    %v91 = vld [vmem:[#allocation7 + $0x98] sm:$0xff]
    %v92 = vld [vmem:[#allocation7 + $0xa0] sm:$0xff]
    %v93 = vld [vmem:[#allocation7 + $0xa8] sm:$0xff]
    %v94 = vld [vmem:[#allocation7 + $0xb0] sm:$0xff]
    %v95 = vld [vmem:[#allocation7 + $0xb8] sm:$0xff]
    %v96 = vld [vmem:[#allocation7 + $0xc0] sm:$0xff]
    %v97 = vld [vmem:[#allocation7 + $0xc8] sm:$0xff]
    %v98 = vld [vmem:[#allocation7 + $0xd0] sm:$0xff]
    %v99 = vld [vmem:[#allocation7 + $0xd8] sm:$0xff]
    %v100 = vld [vmem:[#allocation7 + $0xe0] sm:$0xff]
    %v101 = vld [vmem:[#allocation7 + $0xe8] sm:$0xff]
    %v102 = vld [vmem:[#allocation7 + $0xf0] sm:$0xff]
    %v103 = vld [vmem:[#allocation7 + $0xf8] sm:$0xff]
    %v104 = vld [vmem:[#allocation7 + $0x100] sm:$0xff]
    %v105 = vld [vmem:[#allocation7 + $0x108] sm:$0xff]
    %v106 = vld [vmem:[#allocation7 + $0x110] sm:$0xff]
    %v107 = vld [vmem:[#allocation7 + $0x118] sm:$0xff]
    %v108 = vld [vmem:[#allocation7 + $0x120] sm:$0xff]
    %v109 = vld [vmem:[#allocation7 + $0x128] sm:$0xff]
    %v110 = vld [vmem:[#allocation7 + $0x130] sm:$0xff]
    %v111 = vld [vmem:[#allocation7 + $0x138] sm:$0xff]
    %v112 = vld [vmem:[#allocation7 + $0x140] sm:$0xff]
    %v113 = vld [vmem:[#allocation7 + $0x148] sm:$0xff]
    %v114 = vld [vmem:[#allocation7 + $0x150] sm:$0xff]
    %v115 = vld [vmem:[#allocation7 + $0x158] sm:$0xff]
    %v116 = vld [vmem:[#allocation7 + $0x160] sm:$0xff]
    %v117 = vld [vmem:[#allocation7 + $0x168] sm:$0xff]
    %v118 = vld [vmem:[#allocation7 + $0x170] sm:$0xff]
    %v119 = vld [vmem:[#allocation7 + $0x178] sm:$0xff]
    %v120 = vld [vmem:[#allocation7 + $0x180] sm:$0xff]
    %v121 = vld [vmem:[#allocation7 + $0x188] sm:$0xff]
    %v122 = vld [vmem:[#allocation7 + $0x190] sm:$0xff]
    %v123 = vld [vmem:[#allocation7 + $0x198] sm:$0xff]
    %v124 = vld [vmem:[#allocation7 + $0x1a0] sm:$0xff]
    %v125 = vld [vmem:[#allocation7 + $0x1a8] sm:$0xff]
    %v126 = vld [vmem:[#allocation7 + $0x1b0] sm:$0xff]
    %v127 = vld [vmem:[#allocation7 + $0x1b8] sm:$0xff]
    %v128 = vld [vmem:[#allocation7 + $0x1c0] sm:$0xff]
    %v129 = vld [vmem:[#allocation7 + $0x1c8] sm:$0xff]
    %v130 = vld [vmem:[#allocation7 + $0x1d0] sm:$0xff]
    %v131 = vld [vmem:[#allocation7 + $0x1d8] sm:$0xff]
    %v132 = vld [vmem:[#allocation7 + $0x1e0] sm:$0xff]
    %v133 = vld [vmem:[#allocation7 + $0x1e8] sm:$0xff]
    %v134 = vld [vmem:[#allocation7 + $0x1f0] sm:$0xff]
    %v135 = vld [vmem:[#allocation7 + $0x1f8] sm:$0xff]
    %v136 = vld [vmem:[#allocation7 + $0x200] sm:$0xff]
    %v137 = vld [vmem:[#allocation7 + $0x208] sm:$0xff]
    %v138 = vld [vmem:[#allocation7 + $0x210] sm:$0xff]
    %v139 = vld [vmem:[#allocation7 + $0x218] sm:$0xff]
    %v140 = vld [vmem:[#allocation7 + $0x220] sm:$0xff]
    %v141 = vld [vmem:[#allocation7 + $0x228] sm:$0xff]
    %v142 = vld [vmem:[#allocation7 + $0x230] sm:$0xff]
    %v143 = vld [vmem:[#allocation7 + $0x238] sm:$0xff]
    %v144 = vld [vmem:[#allocation7 + $0x240] sm:$0xff]
    %v145 = vld [vmem:[#allocation7 + $0x248] sm:$0xff]
    %v146 = vld [vmem:[#allocation7 + $0x250] sm:$0xff]
    %v147 = vld [vmem:[#allocation7 + $0x258] sm:$0xff]
    %v148 = vld [vmem:[#allocation7 + $0x260] sm:$0xff]
    %v149 = vld [vmem:[#allocation7 + $0x268] sm:$0xff]
    %v150 = vld [vmem:[#allocation7 + $0x270] sm:$0xff]
    %v151 = vld [vmem:[#allocation7 + $0x278] sm:$0xff]
    %v152 = vld [vmem:[#allocation7 + $0x280] sm:$0xff]
    %v153 = vld [vmem:[#allocation7 + $0x288] sm:$0xff]
    %v154 = vld [vmem:[#allocation7 + $0x290] sm:$0xff]
    %v155 = vld [vmem:[#allocation7 + $0x298] sm:$0xff]
    %v156 = vld [vmem:[#allocation7 + $0x2a0] sm:$0xff]
    %v157 = vld [vmem:[#allocation7 + $0x2a8] sm:$0xff]
    %v158 = vld [vmem:[#allocation7 + $0x2b0] sm:$0xff]
    %v159 = vld [vmem:[#allocation7 + $0x2b8] sm:$0xff]
    %v160 = vld [vmem:[#allocation7 + $0x2c0] sm:$0xff]
    %v161 = vld [vmem:[#allocation7 + $0x2c8] sm:$0xff]
    %v162 = vld [vmem:[#allocation7 + $0x2d0] sm:$0xff]
    %v163 = vld [vmem:[#allocation7 + $0x2d8] sm:$0xff]
    %v164 = vld [vmem:[#allocation7 + $0x2e0] sm:$0xff]
    %v165 = vld [vmem:[#allocation7 + $0x2e8] sm:$0xff]
    %v166 = vld [vmem:[#allocation7 + $0x2f0] sm:$0xff]
    %v167 = vld [vmem:[#allocation7 + $0x2f8] sm:$0xff]
    %v168 = vld [vmem:[#allocation7 + $0x300] sm:$0xff]
    %v169 = vld [vmem:[#allocation7 + $0x308] sm:$0xff]
    %v170 = vld [vmem:[#allocation7 + $0x310] sm:$0xff]
    %v171 = vld [vmem:[#allocation7 + $0x318] sm:$0xff]
    %v172 = vld [vmem:[#allocation7 + $0x320] sm:$0xff]
    %v173 = vld [vmem:[#allocation7 + $0x328] sm:$0xff]
    %v174 = vld [vmem:[#allocation7 + $0x330] sm:$0xff]
    %v175 = vld [vmem:[#allocation7 + $0x338] sm:$0xff]
    %v176 = vld [vmem:[#allocation7 + $0x340] sm:$0xff]
    %v177 = vld [vmem:[#allocation7 + $0x348] sm:$0xff]
    %v178 = vld [vmem:[#allocation7 + $0x350] sm:$0xff]
    %v179 = vld [vmem:[#allocation7 + $0x358] sm:$0xff]
    %v180 = vld [vmem:[#allocation7 + $0x360] sm:$0xff]
    %v181 = vld [vmem:[#allocation7 + $0x368] sm:$0xff]
    %v182 = vld [vmem:[#allocation7 + $0x370] sm:$0xff]
    %v183 = vld [vmem:[#allocation7 + $0x378] sm:$0xff]
    %v184 = vld [vmem:[#allocation7 + $0x380] sm:$0xff]
    %v185 = vld [vmem:[#allocation7 + $0x388] sm:$0xff]
    %v186 = vld [vmem:[#allocation7 + $0x390] sm:$0xff]
    %v187 = vld [vmem:[#allocation7 + $0x398] sm:$0xff]
    %v188 = vld [vmem:[#allocation7 + $0x3a0] sm:$0xff]
    %v189 = vld [vmem:[#allocation7 + $0x3a8] sm:$0xff]
    %v190 = vld [vmem:[#allocation7 + $0x3b0] sm:$0xff]
    %v191 = vld [vmem:[#allocation7 + $0x3b8] sm:$0xff]
    %v192 = vld [vmem:[#allocation7 + $0x3c0] sm:$0xff]
    %v193 = vld [vmem:[#allocation7 + $0x3c8] sm:$0xff]
    %v194 = vld [vmem:[#allocation7 + $0x3d0] sm:$0xff]
    %v195 = vld [vmem:[#allocation7 + $0x3d8] sm:$0xff]
    %v196 = vld [vmem:[#allocation7 + $0x3e0] sm:$0xff]
    %v197 = vld [vmem:[#allocation7 + $0x3e8] sm:$0xff]
    %v198 = vld [vmem:[#allocation7 + $0x3f0] sm:$0xff]
    %v199 = vld [vmem:[#allocation7 + $0x3f8] sm:$0xff]
    %v200 = vld [vmem:[#allocation7 + $0x400] sm:$0xff]
    %v201 = vld [vmem:[#allocation7 + $0x408] sm:$0xff]
    %v202 = vld [vmem:[#allocation7 + $0x410] sm:$0xff]
    %v203 = vld [vmem:[#allocation7 + $0x418] sm:$0xff]
    %v204 = vld [vmem:[#allocation7 + $0x420] sm:$0xff]
    %v205 = vld [vmem:[#allocation7 + $0x428] sm:$0xff]
    %v206 = vld [vmem:[#allocation7 + $0x430] sm:$0xff]
    %v207 = vld [vmem:[#allocation7 + $0x438] sm:$0xff]
    %v208 = vld [vmem:[#allocation7 + $0x440] sm:$0xff]
    %v209 = vld [vmem:[#allocation7 + $0x448] sm:$0xff]
    %v210 = vld [vmem:[#allocation7 + $0x450] sm:$0xff]
    %v211 = vld [vmem:[#allocation7 + $0x458] sm:$0xff]
    %v212 = vld [vmem:[#allocation7 + $0x460] sm:$0xff]
    %v213 = vld [vmem:[#allocation7 + $0x468] sm:$0xff]
    %v214 = vld [vmem:[#allocation7 + $0x470] sm:$0xff]
    %v215 = vld [vmem:[#allocation7 + $0x478] sm:$0xff]
    %v216 = vld [vmem:[#allocation7 + $0x480] sm:$0xff]
    %v217 = vld [vmem:[#allocation7 + $0x488] sm:$0xff]
    %v218 = vld [vmem:[#allocation7 + $0x490] sm:$0xff]
    %v219 = vld [vmem:[#allocation7 + $0x498] sm:$0xff]
    %v220 = vld [vmem:[#allocation7 + $0x4a0] sm:$0xff]
    %v221 = vld [vmem:[#allocation7 + $0x4a8] sm:$0xff]
    %v222 = vld [vmem:[#allocation7 + $0x4b0] sm:$0xff]
    %v223 = vld [vmem:[#allocation7 + $0x4b8] sm:$0xff]
    %v224 = vld [vmem:[#allocation7 + $0x4c0] sm:$0xff]
    %v225 = vld [vmem:[#allocation7 + $0x4c8] sm:$0xff]
    %v226 = vld [vmem:[#allocation7 + $0x4d0] sm:$0xff]
    %v227 = vld [vmem:[#allocation7 + $0x4d8] sm:$0xff]
    %v228 = vld [vmem:[#allocation7 + $0x4e0] sm:$0xff]
    %v229 = vld [vmem:[#allocation7 + $0x4e8] sm:$0xff]
    %v230 = vld [vmem:[#allocation7 + $0x4f0] sm:$0xff]
    %v231 = vld [vmem:[#allocation7 + $0x4f8] sm:$0xff]
    %v232 = vld [vmem:[#allocation7 + $0x500] sm:$0xff]
    %v233 = vld [vmem:[#allocation7 + $0x508] sm:$0xff]
    %v234 = vld [vmem:[#allocation7 + $0x510] sm:$0xff]
    %v235 = vld [vmem:[#allocation7 + $0x518] sm:$0xff]
    %v236 = vld [vmem:[#allocation7 + $0x520] sm:$0xff]
    %v237 = vld [vmem:[#allocation7 + $0x528] sm:$0xff]
    %v238 = vld [vmem:[#allocation7 + $0x530] sm:$0xff]
    %v239 = vld [vmem:[#allocation7 + $0x538] sm:$0xff]
    %v240 = vld [vmem:[#allocation7 + $0x540] sm:$0xff]
    %v241 = vld [vmem:[#allocation7 + $0x548] sm:$0xff]
    %v242 = vld [vmem:[#allocation7 + $0x550] sm:$0xff]
    %v243 = vld [vmem:[#allocation7 + $0x558] sm:$0xff]
    %v244 = vld [vmem:[#allocation7 + $0x560] sm:$0xff]
    %v245 = vld [vmem:[#allocation7 + $0x568] sm:$0xff]
    %v246 = vld [vmem:[#allocation7 + $0x570] sm:$0xff]
    %v247 = vld [vmem:[#allocation7 + $0x578] sm:$0xff]
    %v248 = vld [vmem:[#allocation7 + $0x580] sm:$0xff]
    %v249 = vld [vmem:[#allocation7 + $0x588] sm:$0xff]
    %v250 = vld [vmem:[#allocation7 + $0x590] sm:$0xff]
    %v251 = vld [vmem:[#allocation7 + $0x598] sm:$0xff]
    %v252 = vld [vmem:[#allocation7 + $0x5a0] sm:$0xff]
    %v253 = vld [vmem:[#allocation7 + $0x5a8] sm:$0xff]
    %v254 = vld [vmem:[#allocation7 + $0x5b0] sm:$0xff]
    %v255 = vld [vmem:[#allocation7 + $0x5b8] sm:$0xff]
    %v256 = vld [vmem:[#allocation7 + $0x5c0] sm:$0xff]
    %v257 = vld [vmem:[#allocation7 + $0x5c8] sm:$0xff]
    %v258 = vld [vmem:[#allocation7 + $0x5d0] sm:$0xff]
    %v259 = vld [vmem:[#allocation7 + $0x5d8] sm:$0xff]
    %v260 = vld [vmem:[#allocation7 + $0x5e0] sm:$0xff]
    %v261 = vld [vmem:[#allocation7 + $0x5e8] sm:$0xff]
    %v262 = vld [vmem:[#allocation7 + $0x5f0] sm:$0xff]
    %v263 = vld [vmem:[#allocation7 + $0x5f8] sm:$0xff]
    %264 = vmatprep.subr.mxu0 %v169
    %265 = vmatpush1.msra.mxu0 %v168
    %266 = vmatprep.subr.mxu0 %v175
    %267 = vmatpush1.msra.mxu0 %v174
    %268 = vmatprep.subr.mxu0 %v181
    %269 = vmatpush1.msra.mxu0 %v180
    %270 = vmatprep.subr.mxu0 %v187
    %271 = vmatpush1.msra.mxu0 %v186
    %272 = vmatprep.subr.mxu0 %v193
    %273 = vmatpush1.msra.mxu0 %v192
    %274 = vmatprep.subr.mxu0 %v199
    %275 = vmatpush1.msra.mxu0 %v198
    %276 = vmatprep.subr.mxu0 %v205
    %277 = vmatpush1.msra.mxu0 %v204
    %278 = vmatprep.subr.mxu0 %v211
    %279 = vmatpush1.msra.mxu0 %v210
    %280 = vmatprep.subr.mxu0 %v217
    %281 = vmatpush1.msra.mxu0 %v216
    %282 = vmatprep.subr.mxu0 %v223
    %283 = vmatpush1.msra.mxu0 %v222
    %284 = vmatprep.subr.mxu0 %v229
    %285 = vmatpush1.msra.mxu0 %v228
    %286 = vmatprep.subr.mxu0 %v235
    %287 = vmatpush1.msra.mxu0 %v234
    %288 = vmatprep.subr.mxu0 %v241
    %289 = vmatpush1.msra.mxu0 %v240
    %290 = vmatprep.subr.mxu0 %v247
    %291 = vmatpush1.msra.mxu0 %v246
    %292 = vmatprep.subr.mxu0 %v253
    %293 = vmatpush1.msra.mxu0 %v252
    %294 = vmatprep.subr.mxu0 %v259
    %295 = vmatpush1.msra.mxu0 %v258
    %296 = vmatprep.subr.mxu0 0.0
    %297 = vmatpush1.msra.mxu0 0.0
    %298 = vmatprep.subr.mxu0 0.0
    %299 = vmatpush1.msra.mxu0 0.0
    %300 = vmatprep.subr.mxu0 0.0
    %301 = vmatpush1.msra.mxu0 0.0
    %302 = vmatprep.subr.mxu0 0.0
    %303 = vmatpush1.msra.mxu0 0.0
    %304 = vmatprep.subr.mxu0 0.0
    %305 = vmatpush1.msra.mxu0 0.0
    %306 = vmatprep.subr.mxu0 0.0
    %307 = vmatpush1.msra.mxu0 0.0
    %308 = vmatprep.subr.mxu0 0.0
    %309 = vmatpush1.msra.mxu0 0.0
    %310 = vmatprep.subr.mxu0 0.0
    %311 = vmatpush1.msra.mxu0 0.0
    %312 = vmatprep.subr.mxu0 0.0
    %313 = vmatpush1.msra.mxu0 0.0
    %314 = vmatprep.subr.mxu0 0.0
    %315 = vmatpush1.msra.mxu0 0.0
    %316 = vmatprep.subr.mxu0 0.0
    %317 = vmatpush1.msra.mxu0 0.0
    %318 = vmatprep.subr.mxu0 0.0
    %319 = vmatpush1.msra.mxu0 0.0
    %320 = vmatprep.subr.mxu0 0.0
    %321 = vmatpush1.msra.mxu0 0.0
    %322 = vmatprep.subr.mxu0 0.0
    %323 = vmatpush1.msra.mxu0 0.0
    %324 = vmatprep.subr.mxu0 0.0
    %325 = vmatpush1.msra.mxu0 0.0
    %326 = vmatprep.subr.mxu0 0.0
    %327 = vmatpush1.msra.mxu0 0.0
    %328 = vmatprep.mubr.f32.mxu0 0.0
    %329 = vmatmul.mubr.f32.gmra.mrb[0].mxu0 %v70
    %v330 = vpop.f32.mrb[0].mxu0
    %v331 = vadd.f32 0.0, %v330
    %v332 = vpop.f32.mrb[0].mxu0
    %v333 = vadd.f32 0.0, %v332
    %334 = vmatprep.mubr.f32.mxu0 0.0
    %335 = vmatmul.mubr.f32.gmra.mrb[0].mxu0 %v71
    %v336 = vpop.f32.mrb[0].mxu0
    %v337 = vadd.f32 0.0, %v336
    %v338 = vpop.f32.mrb[0].mxu0
    %v339 = vadd.f32 0.0, %v338
    %340 = vdwg.mxu0
    %341 = vmatprep.subr.mxu0 %v171
    %342 = vmatpush1.msra.mxu0 %v170
    %343 = vmatprep.subr.mxu0 %v177
    %344 = vmatpush1.msra.mxu0 %v176
    %345 = vmatprep.subr.mxu0 %v183
    %346 = vmatpush1.msra.mxu0 %v182
    %347 = vmatprep.subr.mxu0 %v189
    %348 = vmatpush1.msra.mxu0 %v188
    %349 = vmatprep.subr.mxu0 %v195
    %350 = vmatpush1.msra.mxu0 %v194
    %351 = vmatprep.subr.mxu0 %v201
    %352 = vmatpush1.msra.mxu0 %v200
    %353 = vmatprep.subr.mxu0 %v207
    %354 = vmatpush1.msra.mxu0 %v206
    %355 = vmatprep.subr.mxu0 %v213
    %356 = vmatpush1.msra.mxu0 %v212
    %357 = vmatprep.subr.mxu0 %v219
    %358 = vmatpush1.msra.mxu0 %v218
    %359 = vmatprep.subr.mxu0 %v225
    %360 = vmatpush1.msra.mxu0 %v224
    %361 = vmatprep.subr.mxu0 %v231
    %362 = vmatpush1.msra.mxu0 %v230
    %363 = vmatprep.subr.mxu0 %v237
    %364 = vmatpush1.msra.mxu0 %v236
    %365 = vmatprep.subr.mxu0 %v243
    %366 = vmatpush1.msra.mxu0 %v242
    %367 = vmatprep.subr.mxu0 %v249
    %368 = vmatpush1.msra.mxu0 %v248
    %369 = vmatprep.subr.mxu0 %v255
    %370 = vmatpush1.msra.mxu0 %v254
    %371 = vmatprep.subr.mxu0 %v261
    %372 = vmatpush1.msra.mxu0 %v260
    %373 = vmatprep.subr.mxu0 0.0
    %374 = vmatpush1.msra.mxu0 0.0
    %375 = vmatprep.subr.mxu0 0.0
    %376 = vmatpush1.msra.mxu0 0.0
    %377 = vmatprep.subr.mxu0 0.0
    %378 = vmatpush1.msra.mxu0 0.0
    %379 = vmatprep.subr.mxu0 0.0
    %380 = vmatpush1.msra.mxu0 0.0
    %381 = vmatprep.subr.mxu0 0.0
    %382 = vmatpush1.msra.mxu0 0.0
    %383 = vmatprep.subr.mxu0 0.0
    %384 = vmatpush1.msra.mxu0 0.0
    %385 = vmatprep.subr.mxu0 0.0
    %386 = vmatpush1.msra.mxu0 0.0
    %387 = vmatprep.subr.mxu0 0.0
    %388 = vmatpush1.msra.mxu0 0.0
    %389 = vmatprep.subr.mxu0 0.0
    %390 = vmatpush1.msra.mxu0 0.0
    %391 = vmatprep.subr.mxu0 0.0
    %392 = vmatpush1.msra.mxu0 0.0
    %393 = vmatprep.subr.mxu0 0.0
    %394 = vmatpush1.msra.mxu0 0.0
    %395 = vmatprep.subr.mxu0 0.0
    %396 = vmatpush1.msra.mxu0 0.0
    %397 = vmatprep.subr.mxu0 0.0
    %398 = vmatpush1.msra.mxu0 0.0
    %399 = vmatprep.subr.mxu0 0.0
    %400 = vmatpush1.msra.mxu0 0.0
    %401 = vmatprep.subr.mxu0 0.0
    %402 = vmatpush1.msra.mxu0 0.0
    %403 = vmatprep.subr.mxu0 0.0
    %404 = vmatpush1.msra.mxu0 0.0
    %405 = vmatprep.mubr.f32.mxu0 0.0
    %406 = vmatmul.mubr.f32.gmra.mrb[0].mxu0 %v70
    %v407 = vpop.f32.mrb[0].mxu0
    %v408 = vadd.f32 0.0, %v407
    %v409 = vpop.f32.mrb[0].mxu0
    %v410 = vadd.f32 0.0, %v409
    %411 = vmatprep.mubr.f32.mxu0 0.0
    %412 = vmatmul.mubr.f32.gmra.mrb[0].mxu0 %v71
    %v413 = vpop.f32.mrb[0].mxu0
    %v414 = vadd.f32 0.0, %v413
    %v415 = vpop.f32.mrb[0].mxu0
    %v416 = vadd.f32 0.0, %v415
    %417 = vdwg.mxu0
    %418 = vmatprep.subr.mxu0 %v173
    %419 = vmatpush1.msra.mxu0 %v172
    %420 = vmatprep.subr.mxu0 %v179
    %421 = vmatpush1.msra.mxu0 %v178
    %422 = vmatprep.subr.mxu0 %v185
    %423 = vmatpush1.msra.mxu0 %v184
    %424 = vmatprep.subr.mxu0 %v191
    %425 = vmatpush1.msra.mxu0 %v190
    %426 = vmatprep.subr.mxu0 %v197
    %427 = vmatpush1.msra.mxu0 %v196
    %428 = vmatprep.subr.mxu0 %v203
    %429 = vmatpush1.msra.mxu0 %v202
    %430 = vmatprep.subr.mxu0 %v209
    %431 = vmatpush1.msra.mxu0 %v208
    %432 = vmatprep.subr.mxu0 %v215
    %433 = vmatpush1.msra.mxu0 %v214
    %434 = vmatprep.subr.mxu0 %v221
    %435 = vmatpush1.msra.mxu0 %v220
    %436 = vmatprep.subr.mxu0 %v227
    %437 = vmatpush1.msra.mxu0 %v226
    %438 = vmatprep.subr.mxu0 %v233
    %439 = vmatpush1.msra.mxu0 %v232
    %440 = vmatprep.subr.mxu0 %v239
    %441 = vmatpush1.msra.mxu0 %v238
    %442 = vmatprep.subr.mxu0 %v245
    %443 = vmatpush1.msra.mxu0 %v244
    %444 = vmatprep.subr.mxu0 %v251
    %445 = vmatpush1.msra.mxu0 %v250
    %446 = vmatprep.subr.mxu0 %v257
    %447 = vmatpush1.msra.mxu0 %v256
    %448 = vmatprep.subr.mxu0 %v263
    %449 = vmatpush1.msra.mxu0 %v262
    %450 = vmatprep.subr.mxu0 0.0
    %451 = vmatpush1.msra.mxu0 0.0
    %452 = vmatprep.subr.mxu0 0.0
    %453 = vmatpush1.msra.mxu0 0.0
    %454 = vmatprep.subr.mxu0 0.0
    %455 = vmatpush1.msra.mxu0 0.0
    %456 = vmatprep.subr.mxu0 0.0
    %457 = vmatpush1.msra.mxu0 0.0
    %458 = vmatprep.subr.mxu0 0.0
    %459 = vmatpush1.msra.mxu0 0.0
    %460 = vmatprep.subr.mxu0 0.0
    %461 = vmatpush1.msra.mxu0 0.0
    %462 = vmatprep.subr.mxu0 0.0
    %463 = vmatpush1.msra.mxu0 0.0
    %464 = vmatprep.subr.mxu0 0.0
    %465 = vmatpush1.msra.mxu0 0.0
    %466 = vmatprep.subr.mxu0 0.0
    %467 = vmatpush1.msra.mxu0 0.0
    %468 = vmatprep.subr.mxu0 0.0
    %469 = vmatpush1.msra.mxu0 0.0
    %470 = vmatprep.subr.mxu0 0.0
    %471 = vmatpush1.msra.mxu0 0.0
    %472 = vmatprep.subr.mxu0 0.0
    %473 = vmatpush1.msra.mxu0 0.0
    %474 = vmatprep.subr.mxu0 0.0
    %475 = vmatpush1.msra.mxu0 0.0
    %476 = vmatprep.subr.mxu0 0.0
    %477 = vmatpush1.msra.mxu0 0.0
    %478 = vmatprep.subr.mxu0 0.0
    %479 = vmatpush1.msra.mxu0 0.0
    %480 = vmatprep.subr.mxu0 0.0
    %481 = vmatpush1.msra.mxu0 0.0
    %482 = vmatprep.mubr.f32.mxu0 0.0
    %483 = vmatmul.mubr.f32.gmra.mrb[0].mxu0 %v70
    %v484 = vpop.f32.mrb[0].mxu0
    %v485 = vadd.f32 0.0, %v484
    %v486 = vpop.f32.mrb[0].mxu0
    %v487 = vadd.f32 0.0, %v486
    %488 = vmatprep.mubr.f32.mxu0 0.0
    %489 = vmatmul.mubr.f32.gmra.mrb[0].mxu0 %v71
    %v490 = vpop.f32.mrb[0].mxu0
    %v491 = vadd.f32 0.0, %v490
    %v492 = vpop.f32.mrb[0].mxu0
    %v493 = vadd.f32 0.0, %v492
    %494 = vdwg.mxu0
    %495 = vmatprep.subr.mxu0 %v73
    %496 = vmatpush1.msra.mxu0 %v72
    %497 = vmatprep.subr.mxu0 %v79
    %498 = vmatpush1.msra.mxu0 %v78
    %499 = vmatprep.subr.mxu0 %v85
    %500 = vmatpush1.msra.mxu0 %v84
    %501 = vmatprep.subr.mxu0 %v91
    %502 = vmatpush1.msra.mxu0 %v90
    %503 = vmatprep.subr.mxu0 %v97
    %504 = vmatpush1.msra.mxu0 %v96
    %505 = vmatprep.subr.mxu0 %v103
    %506 = vmatpush1.msra.mxu0 %v102
    %507 = vmatprep.subr.mxu0 %v109
    %508 = vmatpush1.msra.mxu0 %v108
    %509 = vmatprep.subr.mxu0 %v115
    %510 = vmatpush1.msra.mxu0 %v114
    %511 = vmatprep.subr.mxu0 %v121
    %512 = vmatpush1.msra.mxu0 %v120
    %513 = vmatprep.subr.mxu0 %v127
    %514 = vmatpush1.msra.mxu0 %v126
    %515 = vmatprep.subr.mxu0 %v133
    %516 = vmatpush1.msra.mxu0 %v132
    %517 = vmatprep.subr.mxu0 %v139
    %518 = vmatpush1.msra.mxu0 %v138
    %519 = vmatprep.subr.mxu0 %v145
    %520 = vmatpush1.msra.mxu0 %v144
    %521 = vmatprep.subr.mxu0 %v151
    %522 = vmatpush1.msra.mxu0 %v150
    %523 = vmatprep.subr.mxu0 %v157
    %524 = vmatpush1.msra.mxu0 %v156
    %525 = vmatprep.subr.mxu0 %v163
    %526 = vmatpush1.msra.mxu0 %v162
    %527 = vmatprep.subr.mxu0 0.0
    %528 = vmatpush1.msra.mxu0 0.0
    %529 = vmatprep.subr.mxu0 0.0
    %530 = vmatpush1.msra.mxu0 0.0
    %531 = vmatprep.subr.mxu0 0.0
    %532 = vmatpush1.msra.mxu0 0.0
    %533 = vmatprep.subr.mxu0 0.0
    %534 = vmatpush1.msra.mxu0 0.0
    %535 = vmatprep.subr.mxu0 0.0
    %536 = vmatpush1.msra.mxu0 0.0
    %537 = vmatprep.subr.mxu0 0.0
    %538 = vmatpush1.msra.mxu0 0.0
    %539 = vmatprep.subr.mxu0 0.0
    %540 = vmatpush1.msra.mxu0 0.0
    %541 = vmatprep.subr.mxu0 0.0
    %542 = vmatpush1.msra.mxu0 0.0
    %543 = vmatprep.subr.mxu0 0.0
    %544 = vmatpush1.msra.mxu0 0.0
    %545 = vmatprep.subr.mxu0 0.0
    %546 = vmatpush1.msra.mxu0 0.0
    %547 = vmatprep.subr.mxu0 0.0
    %548 = vmatpush1.msra.mxu0 0.0
    %549 = vmatprep.subr.mxu0 0.0
    %550 = vmatpush1.msra.mxu0 0.0
    %551 = vmatprep.subr.mxu0 0.0
    %552 = vmatpush1.msra.mxu0 0.0
    %553 = vmatprep.subr.mxu0 0.0
    %554 = vmatpush1.msra.mxu0 0.0
    %555 = vmatprep.subr.mxu0 0.0
    %556 = vmatpush1.msra.mxu0 0.0
    %557 = vmatprep.subr.mxu0 0.0
    %558 = vmatpush1.msra.mxu0 0.0
    %559 = vmatprep.mubr.f32.mxu0 0.0
    %560 = vmatmul.mubr.f32.gmra.mrb[0].mxu0 %v68
    %v561 = vpop.f32.mrb[0].mxu0
    %v562 = vadd.f32 %v331, %v561
    %v563 = vpop.f32.mrb[0].mxu0
    %v564 = vadd.f32 %v333, %v563
    %565 = vmatprep.mubr.f32.mxu0 0.0
    %566 = vmatmul.mubr.f32.gmra.mrb[0].mxu0 %v69
    %v567 = vpop.f32.mrb[0].mxu0
    %v568 = vadd.f32 %v337, %v567
    %v569 = vpop.f32.mrb[0].mxu0
    %v570 = vadd.f32 %v339, %v569
    %571 = vdwg.mxu0
    %572 = vmatprep.subr.mxu0 %v75
    %573 = vmatpush1.msra.mxu0 %v74
    %574 = vmatprep.subr.mxu0 %v81
    %575 = vmatpush1.msra.mxu0 %v80
    %576 = vmatprep.subr.mxu0 %v87
    %577 = vmatpush1.msra.mxu0 %v86
    %578 = vmatprep.subr.mxu0 %v93
    %579 = vmatpush1.msra.mxu0 %v92
    %580 = vmatprep.subr.mxu0 %v99
    %581 = vmatpush1.msra.mxu0 %v98
    %582 = vmatprep.subr.mxu0 %v105
    %583 = vmatpush1.msra.mxu0 %v104
    %584 = vmatprep.subr.mxu0 %v111
    %585 = vmatpush1.msra.mxu0 %v110
    %586 = vmatprep.subr.mxu0 %v117
    %587 = vmatpush1.msra.mxu0 %v116
    %588 = vmatprep.subr.mxu0 %v123
    %589 = vmatpush1.msra.mxu0 %v122
    %590 = vmatprep.subr.mxu0 %v129
    %591 = vmatpush1.msra.mxu0 %v128
    %592 = vmatprep.subr.mxu0 %v135
    %593 = vmatpush1.msra.mxu0 %v134
    %594 = vmatprep.subr.mxu0 %v141
    %595 = vmatpush1.msra.mxu0 %v140
    %596 = vmatprep.subr.mxu0 %v147
    %597 = vmatpush1.msra.mxu0 %v146
    %598 = vmatprep.subr.mxu0 %v153
    %599 = vmatpush1.msra.mxu0 %v152
    %600 = vmatprep.subr.mxu0 %v159
    %601 = vmatpush1.msra.mxu0 %v158
    %602 = vmatprep.subr.mxu0 %v165
    %603 = vmatpush1.msra.mxu0 %v164
    %604 = vmatprep.subr.mxu0 0.0
    %605 = vmatpush1.msra.mxu0 0.0
    %606 = vmatprep.subr.mxu0 0.0
    %607 = vmatpush1.msra.mxu0 0.0
    %608 = vmatprep.subr.mxu0 0.0
    %609 = vmatpush1.msra.mxu0 0.0
    %610 = vmatprep.subr.mxu0 0.0
    %611 = vmatpush1.msra.mxu0 0.0
    %612 = vmatprep.subr.mxu0 0.0
    %613 = vmatpush1.msra.mxu0 0.0
    %614 = vmatprep.subr.mxu0 0.0
    %615 = vmatpush1.msra.mxu0 0.0
    %616 = vmatprep.subr.mxu0 0.0
    %617 = vmatpush1.msra.mxu0 0.0
    %618 = vmatprep.subr.mxu0 0.0
    %619 = vmatpush1.msra.mxu0 0.0
    %620 = vmatprep.subr.mxu0 0.0
    %621 = vmatpush1.msra.mxu0 0.0
    %622 = vmatprep.subr.mxu0 0.0
    %623 = vmatpush1.msra.mxu0 0.0
    %624 = vmatprep.subr.mxu0 0.0
    %625 = vmatpush1.msra.mxu0 0.0
    %626 = vmatprep.subr.mxu0 0.0
    %627 = vmatpush1.msra.mxu0 0.0
    %628 = vmatprep.subr.mxu0 0.0
    %629 = vmatpush1.msra.mxu0 0.0
    %630 = vmatprep.subr.mxu0 0.0
    %631 = vmatpush1.msra.mxu0 0.0
    %632 = vmatprep.subr.mxu0 0.0
    %633 = vmatpush1.msra.mxu0 0.0
    %634 = vmatprep.subr.mxu0 0.0
    %635 = vmatpush1.msra.mxu0 0.0
    %636 = vmatprep.mubr.f32.mxu0 0.0
    %637 = vmatmul.mubr.f32.gmra.mrb[0].mxu0 %v68
    %v638 = vpop.f32.mrb[0].mxu0
    %v639 = vadd.f32 %v408, %v638
    %v640 = vpop.f32.mrb[0].mxu0
    %v641 = vadd.f32 %v410, %v640
    %642 = vmatprep.mubr.f32.mxu0 0.0
    %643 = vmatmul.mubr.f32.gmra.mrb[0].mxu0 %v69
    %v644 = vpop.f32.mrb[0].mxu0
    %v645 = vadd.f32 %v414, %v644
    %v646 = vpop.f32.mrb[0].mxu0
    %v647 = vadd.f32 %v416, %v646
    %648 = vdwg.mxu0
    %649 = vmatprep.subr.mxu0 %v77
    %650 = vmatpush1.msra.mxu0 %v76
    %651 = vmatprep.subr.mxu0 %v83
    %652 = vmatpush1.msra.mxu0 %v82
    %653 = vmatprep.subr.mxu0 %v89
    %654 = vmatpush1.msra.mxu0 %v88
    %655 = vmatprep.subr.mxu0 %v95
    %656 = vmatpush1.msra.mxu0 %v94
    %657 = vmatprep.subr.mxu0 %v101
    %658 = vmatpush1.msra.mxu0 %v100
    %659 = vmatprep.subr.mxu0 %v107
    %660 = vmatpush1.msra.mxu0 %v106
    %661 = vmatprep.subr.mxu0 %v113
    %662 = vmatpush1.msra.mxu0 %v112
    %663 = vmatprep.subr.mxu0 %v119
    %664 = vmatpush1.msra.mxu0 %v118
    %665 = vmatprep.subr.mxu0 %v125
    %666 = vmatpush1.msra.mxu0 %v124
    %667 = vmatprep.subr.mxu0 %v131
    %668 = vmatpush1.msra.mxu0 %v130
    %669 = vmatprep.subr.mxu0 %v137
    %670 = vmatpush1.msra.mxu0 %v136
    %671 = vmatprep.subr.mxu0 %v143
    %672 = vmatpush1.msra.mxu0 %v142
    %673 = vmatprep.subr.mxu0 %v149
    %674 = vmatpush1.msra.mxu0 %v148
    %675 = vmatprep.subr.mxu0 %v155
    %676 = vmatpush1.msra.mxu0 %v154
    %677 = vmatprep.subr.mxu0 %v161
    %678 = vmatpush1.msra.mxu0 %v160
    %679 = vmatprep.subr.mxu0 %v167
    %680 = vmatpush1.msra.mxu0 %v166
    %681 = vmatprep.subr.mxu0 0.0
    %682 = vmatpush1.msra.mxu0 0.0
    %683 = vmatprep.subr.mxu0 0.0
    %684 = vmatpush1.msra.mxu0 0.0
    %685 = vmatprep.subr.mxu0 0.0
    %686 = vmatpush1.msra.mxu0 0.0
    %687 = vmatprep.subr.mxu0 0.0
    %688 = vmatpush1.msra.mxu0 0.0
    %689 = vmatprep.subr.mxu0 0.0
    %690 = vmatpush1.msra.mxu0 0.0
    %691 = vmatprep.subr.mxu0 0.0
    %692 = vmatpush1.msra.mxu0 0.0
    %693 = vmatprep.subr.mxu0 0.0
    %694 = vmatpush1.msra.mxu0 0.0
    %695 = vmatprep.subr.mxu0 0.0
    %696 = vmatpush1.msra.mxu0 0.0
    %697 = vmatprep.subr.mxu0 0.0
    %698 = vmatpush1.msra.mxu0 0.0
    %699 = vmatprep.subr.mxu0 0.0
    %700 = vmatpush1.msra.mxu0 0.0
    %701 = vmatprep.subr.mxu0 0.0
    %702 = vmatpush1.msra.mxu0 0.0
    %703 = vmatprep.subr.mxu0 0.0
    %704 = vmatpush1.msra.mxu0 0.0
    %705 = vmatprep.subr.mxu0 0.0
    %706 = vmatpush1.msra.mxu0 0.0
    %707 = vmatprep.subr.mxu0 0.0
    %708 = vmatpush1.msra.mxu0 0.0
    %709 = vmatprep.subr.mxu0 0.0
    %710 = vmatpush1.msra.mxu0 0.0
    %711 = vmatprep.subr.mxu0 0.0
    %712 = vmatpush1.msra.mxu0 0.0
    %713 = vmatprep.mubr.f32.mxu0 0.0
    %714 = vmatmul.mubr.f32.gmra.mrb[0].mxu0 %v68
    %v715 = vpop.f32.mrb[0].mxu0
    %v716 = vadd.f32 %v485, %v715
    %v717 = vpop.f32.mrb[0].mxu0
    %v718 = vadd.f32 %v487, %v717
    %719 = vmatprep.mubr.f32.mxu0 0.0
    %720 = vmatmul.mubr.f32.gmra.mrb[0].mxu0 %v69
    %v721 = vpop.f32.mrb[0].mxu0
    %v722 = vadd.f32 %v491, %v721
    %v723 = vpop.f32.mrb[0].mxu0
    %v724 = vadd.f32 %v493, %v723
    %725 = vdwg.mxu0
    %v726 = vld [vmem:[%s5] sm:$0x3f]
    %v728 = vlaneseq
    %v729 = vshrl.u32 %v728, 7
    %v730 = vsub.s32 0, %v729
    %v731 = vrot.slane %v726, %v730
    %v732 = vlaneseq
    %v733 = vshrl.u32 %v732, 7
    %v734 = vsub.s32 1, %v733
    %v735 = vrot.slane %v726, %v734
    %v736 = vlaneseq
    %v737 = vshrl.u32 %v736, 7
    %v738 = vsub.s32 2, %v737
    %v739 = vrot.slane %v726, %v738
    %v740 = vlaneseq
    %v741 = vshrl.u32 %v740, 7
    %v742 = vsub.s32 3, %v741
    %v743 = vrot.slane %v726, %v742
    %v744 = vlaneseq
    %v745 = vshrl.u32 %v744, 7
    %v746 = vsub.s32 4, %v745
    %v747 = vrot.slane %v726, %v746
    %v748 = vlaneseq
    %v749 = vshrl.u32 %v748, 7
    %v750 = vsub.s32 5, %v749
    %v751 = vrot.slane %v726, %v750
    %v758 = vadd.f32 %v562, %v731
    %v759 = vadd.f32 %v564, %v735
    %v760 = vadd.f32 %v639, %v739
    %v761 = vadd.f32 %v641, %v743
    %v762 = vadd.f32 %v716, %v747
    %v763 = vadd.f32 %v718, %v751
    %v764 = vadd.f32 %v568, %v731
    %v765 = vadd.f32 %v570, %v735
    %v766 = vadd.f32 %v645, %v739
    %v767 = vadd.f32 %v647, %v743
    %v768 = vadd.f32 %v722, %v747
    %v769 = vadd.f32 %v724, %v751
    %v770 = vtanh.pop %v758
    %v771 = vtanh.pop %v764
    %v772 = vmul.f32 %v770, 0.5
    %v773 = vmul.f32 %v771, 0.5
    %v774 = vadd.f32 %v772, 0.5
    %v775 = vadd.f32 %v773, 0.5
    %v776 = vtanh.pop %v759
    %v777 = vtanh.pop %v765
    %v778 = vmul.f32 %v776, 0.5
    %v779 = vmul.f32 %v777, 0.5
    %v780 = vadd.f32 %v778, 0.5
    %v781 = vadd.f32 %v779, 0.5
    %v782 = vtanh.pop %v760
    %v783 = vtanh.pop %v766
    %v784 = vmul.f32 %v782, 0.5
    %v785 = vmul.f32 %v783, 0.5
    %v786 = vadd.f32 %v784, 0.5
    %v787 = vadd.f32 %v785, 0.5
    %v788 = vtanh.pop %v761
    %v789 = vtanh.pop %v767
    %v790 = vmul.f32 %v788, 0.5
    %v791 = vmul.f32 %v789, 0.5
    %v792 = vadd.f32 %v790, 0.5
    %v793 = vadd.f32 %v791, 0.5
    %v794 = vtanh.pop %v762
    %v795 = vtanh.pop %v768
    %v796 = vld [vmem:[#allocation5] sm:$0xff]
    %v797 = vld [vmem:[#allocation5 + $0x8] sm:$0xff]
    %v798 = vld [vmem:[%s3] sm:$0xff]
    %v799 = vld [vmem:[%s3 + $0x8] sm:$0xff]
    %801 = vset.pattern.permute.xlu0 0
    %802 = vperm.xlu0 %801, %v798
    %v803 = vpop.permute.xlu0 %802
    %806 = vset.pattern.permute.xlu0 0
    %807 = vperm.xlu0 %806, %v799
    %v808 = vpop.permute.xlu0 %807
    %v810 = vmul.f32 %v780, %v796
    %v811 = vmul.f32 %v781, %v797
    %v812 = vmul.f32 %v774, %v794
    %v813 = vmul.f32 %v775, %v795
    %v814 = vadd.f32 %v810, %v812
    %v815 = vadd.f32 %v811, %v813
    %v816 = vsub.f32 %v814, %v796
    %v817 = vsub.f32 %v815, %v797
    %v818 = vmul.f32 %v803, %v816
    %v819 = vmul.f32 %v808, %v817
    %v820 = vadd.f32 %v796, %v818
    %v821 = vadd.f32 %v797, %v819
    %v822 = vmul.f32 %v792, %v786
    %v823 = vmul.f32 %v793, %v787
    %v824 = vtanh.pop %v820
    %v825 = vtanh.pop %v821
    %v826 = vmul.f32 %v822, %v824
    %v827 = vmul.f32 %v823, %v825
    %v828 = vsub.f32 1.0, %v792
    %v829 = vsub.f32 1.0, %v793
    %v830 = vmul.f32 %v828, %v763
    %v831 = vmul.f32 %v829, %v769
    %v832 = vadd.f32 %v826, %v830
    %v833 = vadd.f32 %v827, %v831
    %v834 = vsub.f32 %v832, %v70
    %v835 = vsub.f32 %v833, %v71
    %v836 = vmul.f32 %v803, %v834
    %v837 = vmul.f32 %v808, %v835
    %v838 = vadd.f32 %v70, %v836
    %v839 = vadd.f32 %v71, %v837
    %840 = vst [vmem:[#allocation8] sm:$0xff] %v838
    %841 = vst [vmem:[#allocation8 + $0x8] sm:$0xff] %v839
    %842 = vst [vmem:[#allocation9] sm:$0xff] %v820
    %843 = vst [vmem:[#allocation9 + $0x8] sm:$0xff] %v821
    // Predicated region
    $region38: #{tpu_custom_call.1} parent=1 // pred_check
      _
    $region39: #{tpu_custom_call.1} parent=1 // pred_check_branch
      %845 = sbr.rel (0) target = $region41
    $region40: #{tpu_custom_call.1} parent=1 // pred_region
      %s847 = ssub.s32 256, 256
      %848 = vsyncadd [#allocation4], %s847
      %s849 = sshll.u32 [#allocation8], 4
      %s850 = int_to_ptr.vmem [resolvable:$true] %s849
      %855 = dma.vmem_to_hbm [thread:$0]  %s850, 256, %s6, [#allocation4], 128, 128, 8
    $region41: #{tpu_custom_call.1} parent=1 // pred_fallthru
      _
    // Predicated region
    $region42: #{tpu_custom_call.1} parent=1 // pred_check
      _
    $region43: #{tpu_custom_call.1} parent=1 // pred_check_branch
      %857 = sbr.rel (0) target = $region45
    $region44: #{tpu_custom_call.1} parent=1 // pred_region
      %s859 = ssub.s32 256, 256
      %860 = vsyncadd [#allocation10], %s859
      %s861 = sshll.u32 [#allocation9], 4
      %s862 = int_to_ptr.vmem [resolvable:$true] %s861
      %867 = dma.vmem_to_hbm [thread:$0]  %s862, 256, %s7, [#allocation10], 128, 128, 8
    $region45: #{tpu_custom_call.1} parent=1 // pred_fallthru
      _
    // Predicated region
    $region46: #{tpu_custom_call.1} parent=1 // pred_check
      _
    $region47: #{tpu_custom_call.1} parent=1 // pred_check_branch
      %869 = sbr.rel (0) target = $region49
    $region48: #{tpu_custom_call.1} parent=1 // pred_region
      %870 = dma.done [#allocation4], 256
    $region49: #{tpu_custom_call.1} parent=1 // pred_fallthru
      _
    // Predicated region
    $region50: #{tpu_custom_call.1} parent=1 // pred_check
      _
    $region51: #{tpu_custom_call.1} parent=1 // pred_check_branch
      %872 = sbr.rel (0) target = $region53
    $region52: #{tpu_custom_call.1} parent=1 // pred_region
      %873 = dma.done [#allocation10], 256
    $region53: #{tpu_custom_call.1} parent=1 // pred_fallthru
      _
    %874 = vsyncpa [#allocation3], 1
    %875 = vsyncpa [#allocation6], 1
    %876 = vsyncpa [#allocation4], 1
    %877 = vsyncpa [#allocation10], 1

</llo_original>
